<compile_context>
chip_gen: v5e
topology: v5e:2x2
jax: 0.10.0
libtpu: 0.0.40
codegen_flags: <defaults>
</compile_context>

<pallas_src>
import jax
import jax.numpy as jnp
from jax import lax
from jax.experimental import pallas as pl
from jax.experimental.pallas import tpu as pltpu


# ----------------------------- "opt" stand-in ------------------------------
class Opt:
    in_Gslices = 1
    in_Dslices = 1
    in_dim = "2D"                  # -> max_proj = target_input[:, 0]
    gt_ignore_neighbour_pxs = True
    condition_on_power = True
    condition_on_frames = True
    condition_on_z = True
    powers = (1.0, 2.0)
    delta_z = 0.1
    isTrain = False
    seg_instance = 0


OPT = Opt()

# ------------------------------- small sizes -------------------------------
B, T, Z, H, W = 2, 1, 4, 16, 16          # real_stack: (B, T, Z, H, W)
N = B * T                                 # dim_concat
HW = H * W                                # 256 -> lane axis
N_COND = (int(OPT.condition_on_power) + int(OPT.condition_on_frames)
          + int(OPT.condition_on_z))
CIN = Z + N_COND                          # seg-net input channels (7)
CIN_PAD = 8                               # sublane-aligned channels (zero pad)
CH = 8                                    # hidden channels
NCLS = 2                                  # binary segmentation logits
OFFSETS = tuple((dy, dx) for dy in (-1, 0, 1) for dx in (-1, 0, 1))


# ============================ fused Pallas kernel ===========================
def _fused_kernel(cond_ref, inp_ref, mp_ref, w1_ref, b1_ref, w2_ref, b2_ref,
                  logits_ref, tgt_ref, loss_ref, iou_ref, xbuf):
    f32 = jnp.float32

    # lane-index helpers / border masks for the flattened (H, W) -> HW layout
    col = lax.broadcasted_iota(jnp.int32, (1, HW), 1)
    if (W & (W - 1)) == 0:
        w_idx = col & (W - 1)              # W is a power of two
    else:
        w_idx = col % W

    def nbr_mask(dy, dx):
        m = jnp.ones((1, HW), jnp.bool_)
        if dy == 1:
            m = m & (col < (H - 1) * W)
        elif dy == -1:
            m = m & (col >= W)
        if dx == 1:
            m = m & (w_idx < W - 1)
        elif dx == -1:
            m = m & (w_idx > 0)
        return m

    masks = {off: nbr_mask(*off) for off in OFFSETS}

    def shift(x, dy, dx):
        # y[..., p] == x[..., p + dy*W + dx]; lanes that wrap across image
        # borders are exactly the ones masked out by masks[(dy, dx)].
        s = dy * W + dx
        if s == 0:
            return x
        return pltpu.roll(x, (-s) % HW, 1)

    # ---- target: 3x3 max-pool (implicit -inf pad) + thresholds -------------
    mp = mp_ref[...]                                   # (N, HW) f32
    pooled = mp
    for dy, dx in OFFSETS:
        if dy == 0 and dx == 0:
            continue
        nb = jnp.where(masks[(dy, dx)], shift(mp, dy, dx), -jnp.inf)
        pooled = jnp.maximum(pooled, nb)
    tgt = jnp.zeros((N, HW), jnp.int32)
    if OPT.gt_ignore_neighbour_pxs:
        tgt = jnp.where(pooled > 1e-6, 255, tgt)       # ignore neighbours
    tgt = jnp.where(mp > 1e-6, 1, tgt)                 # positives
    tgt_ref[...] = tgt                                 # int32 (torch uses int64)

    # ---- seg-net forward + CE / IoU reductions ------------------------------
    xbuf[...] = jnp.zeros((CIN_PAD, HW), f32)          # pad channel stays zero
    ones_row = jnp.ones((1, HW), f32)
    ce_sum = f32(0.0)
    cnt = f32(0.0)
    inter = f32(0.0)
    union = f32(0.0)

    for n in range(N):
        # assemble conditioned input stack (channels on sublanes, HW on lanes)
        xbuf[0:Z, :] = inp_ref[n]                      # (Z, HW)
        for c in range(N_COND):
            xbuf[Z + c:Z + c + 1, :] = ones_row * cond_ref[c, n]
        x_n = xbuf[...]                                # (CIN_PAD, HW)

        # conv3x3 (zero padding) as 9 accumulated matmuls over shifted inputs
        acc = jnp.zeros((CH, HW), f32)
        for k, (dy, dx) in enumerate(OFFSETS):
            xb = jnp.where(masks[(dy, dx)], shift(x_n, dy, dx), 0.0)
            acc = acc + jnp.dot(w1_ref[k], xb, preferred_element_type=f32)
        hid = jnp.maximum(acc + b1_ref[...], 0.0)      # (CH, HW)
        logits = (jnp.dot(w2_ref[...], hid, preferred_element_type=f32)
                  + b2_ref[...])                       # (NCLS, HW), lane dense
        logits_ref[n] = logits

        # CrossEntropy(ignore_index=255) + IoU(class 1) partial sums
        l0 = logits[0:1, :]
        l1 = logits[1:2, :]
        tgt_n = tgt[n:n + 1]
        m = jnp.maximum(l0, l1)
        lse = m + jnp.log(jnp.exp(l0 - m) + jnp.exp(l1 - m))
        picked = jnp.where(tgt_n == 1, l1, l0)
        valid = tgt_n != 255
        vf = valid.astype(f32)
        ce_sum = ce_sum + jnp.sum((lse - picked) * vf)
        cnt = cnt + jnp.sum(vf)
        pred1 = l1 > l0
        t1 = tgt_n == 1
        inter = inter + jnp.sum((pred1 & t1 & valid).astype(f32))
        union = union + jnp.sum(((pred1 | t1) & valid).astype(f32))

    # mean CE over valid px (clamped count; torch returns NaN if none valid)
    loss_ref[0, 0] = ce_sum / jnp.maximum(cnt, 1.0)
    iou_ref[0, 0] = 1.0 - inter / jnp.maximum(union, 1e-6)


_VMEM = pltpu.MemorySpace.VMEM
_SMEM = pltpu.MemorySpace.SMEM

_fused_call = pl.pallas_call(
    _fused_kernel,
    out_shape=(
        jax.ShapeDtypeStruct((N, NCLS, HW), jnp.float32),   # logits
        jax.ShapeDtypeStruct((N, HW), jnp.int32),            # target labels
        jax.ShapeDtypeStruct((1, 1), jnp.float32),           # CE loss
        jax.ShapeDtypeStruct((1, 1), jnp.float32),           # 1 - IoU
    ),
    in_specs=[
        pl.BlockSpec(memory_space=_SMEM),    # cond scalars (N_COND, N)
        pl.BlockSpec(memory_space=_VMEM),    # inp (N, Z, HW)
        pl.BlockSpec(memory_space=_VMEM),    # max_proj (N, HW)
        pl.BlockSpec(memory_space=_VMEM),    # w1 (9, CH, CIN_PAD)
        pl.BlockSpec(memory_space=_VMEM),    # b1 (CH, 1)
        pl.BlockSpec(memory_space=_VMEM),    # w2 (NCLS, CH)
        pl.BlockSpec(memory_space=_VMEM),    # b2 (NCLS, 1)
    ],
    out_specs=(
        pl.BlockSpec(memory_space=_VMEM),
        pl.BlockSpec(memory_space=_VMEM),
        pl.BlockSpec(memory_space=_SMEM),
        pl.BlockSpec(memory_space=_SMEM),
    ),
    scratch_shapes=[pltpu.VMEM((CIN_PAD, HW), jnp.float32)],
)


# ================================ model glue ================================
def init_params(key):
    """Deterministic synthetic net_Seg parameters (conv3x3 -> ReLU -> conv1x1)."""
    k1, k2, k3, k4 = jax.random.split(key, 4)
    w1_conv = jax.random.normal(k1, (3, 3, CIN, CH), jnp.float32) / jnp.sqrt(9.0 * CIN)
    b1 = jax.random.normal(k2, (CH, 1), jnp.float32) * 0.01
    w2 = jax.random.normal(k3, (NCLS, CH), jnp.float32) / jnp.sqrt(float(CH))
    b2 = jax.random.normal(k4, (NCLS, 1), jnp.float32) * 0.01
    # (ky, kx, cin, ch) -> (offset k = ky*3+kx, ch, cin); zero-pad cin -> CIN_PAD
    # so the kernel's per-offset slices and stores are sublane aligned.
    w1 = jnp.transpose(w1_conv, (0, 1, 3, 2)).reshape(9, CH, CIN)
    w1 = jnp.pad(w1, ((0, 0), (0, 0), (0, CIN_PAD - CIN)))
    return (w1, b1, w2, b2)


@jax.jit
def segment_model_forward_test(real_stack, real_slices, power, frames, z_pos,
                               params):
    """forward(data, mode='test'): preprocess_input + compute_Seg_loss fused."""
    # --- preprocess_input ---
    inp = real_stack.reshape(N, Z, H, W)             # Y_2D view (self.input)
    slices = real_slices.reshape(N, Z, H, W)
    max_proj = slices[:, 0].reshape(N, HW)           # in_dim == '2D'

    min_val = min(OPT.powers)
    if min_val == 0:
        min_val = 1.0
        power = power + 1.0
    power_s = power / min_val

    cond_list = []
    if OPT.condition_on_power:
        cond_list.append(power_s)
    if OPT.condition_on_frames:
        cond_list.append(frames)
    if OPT.condition_on_z:
        cond_list.append(z_pos)
    cond = (jnp.stack(cond_list, axis=0).astype(jnp.float32)
            if cond_list else jnp.zeros((1, N), jnp.float32))

    w1, b1, w2, b2 = params
    logits, tgt_flat, loss, iou_loss = _fused_call(
        cond, inp.reshape(N, Z, HW), max_proj, w1, b1, w2, b2)

    pred = logits.reshape(N, NCLS, H, W)             # torch layout, free reshape
    target = tgt_flat.reshape(N, H, W)

    # TODO(synk): train/val branches require the external GAN generator
    # (net_G.generate_fake) and checkpointed net_Seg weights; only the 'test'
    # branch is implemented.  IoU_Loss is external -> implemented as 1 - IoU.
    seg_losses_d = {"test_Loss": loss[0, 0]}
    seg_iou_d = {"test_IoU": iou_loss[0, 0]}
    return seg_losses_d, seg_iou_d, inp, target, pred


# =================================== main ===================================
if __name__ == "__main__":
    key = jax.random.PRNGKey(0)
    k_stack, k_slices, k_params = jax.random.split(key, 3)

    real_stack = jax.random.normal(k_stack, (B, T, Z, H, W), jnp.float32)
    # sparse positives so the target has a mix of {0, 1, 255}
    real_slices = jax.random.uniform(k_slices, (B, T, Z, H, W), jnp.float32) - 0.7
    power = jnp.array([1.0, 2.0], jnp.float32)
    frames = jnp.array([10.0, 20.0], jnp.float32)
    z_pos = jnp.array([0.5, 1.5], jnp.float32)

    params = init_params(k_params)

    out = segment_model_forward_test(real_stack, real_slices, power, frames,
                                     z_pos, params)
    jax.block_until_ready(out)

    seg_loss_d, seg_iou_d, inp, target, pred = out
    assert pred.shape == (N, NCLS, H, W)
    assert target.shape == (N, H, W)
    assert inp.shape == (N, Z, H, W)
    assert jnp.isfinite(seg_loss_d["test_Loss"])
    assert jnp.isfinite(seg_iou_d["test_IoU"])
    print("KERNEL_OK")
</pallas_src>

<mosaic_0001>
module attributes {stable_mosaic.version = 11 : i64} {
  func.func @_fused_kernel(%arg0: memref<3x2xf32, #tpu.memory_space<smem>>, %arg1: memref<2x4x256xf32, #tpu.memory_space<vmem>>, %arg2: memref<2x256xf32, #tpu.memory_space<vmem>>, %arg3: memref<9x8x8xf32, #tpu.memory_space<vmem>>, %arg4: memref<8x1xf32, #tpu.memory_space<vmem>>, %arg5: memref<2x8xf32, #tpu.memory_space<vmem>>, %arg6: memref<2x1xf32, #tpu.memory_space<vmem>>, %arg7: memref<2x2x256xf32, #tpu.memory_space<vmem>>, %arg8: memref<2x256xi32, #tpu.memory_space<vmem>>, %arg9: memref<1x1xf32, #tpu.memory_space<smem>>, %arg10: memref<1x1xf32, #tpu.memory_space<smem>>, %arg11: memref<8x256xf32, #tpu.memory_space<vmem>>) attributes {dimension_semantics = [], scalar_prefetch = 0 : i64, scratch_operands = 1 : i64, tpu.core_type = #tpu.core_type<tc>} {
    %0 = tpu.iota {dimensions = array<i32: 1>} : vector<1x256xi32>
    %c15_i32 = arith.constant 15 : i32
    %1 = vector.broadcast %c15_i32 : i32 to vector<1x256xi32>
    %2 = arith.andi %0, %1 : vector<1x256xi32>
    %true = arith.constant true
    %3 = vector.broadcast %true : i1 to vector<1x256xi1>
    %c16_i32 = arith.constant 16 : i32
    %4 = vector.broadcast %c16_i32 : i32 to vector<1x256xi32>
    %5 = arith.cmpi sge, %0, %4 : vector<1x256xi32>
    %6 = arith.andi %3, %5 : vector<1x256xi1>
    %c0_i32 = arith.constant 0 : i32
    %7 = vector.broadcast %c0_i32 : i32 to vector<1x256xi32>
    %8 = arith.cmpi sgt, %2, %7 : vector<1x256xi32>
    %9 = arith.andi %6, %8 : vector<1x256xi1>
    %true_0 = arith.constant true
    %10 = vector.broadcast %true_0 : i1 to vector<1x256xi1>
    %c16_i32_1 = arith.constant 16 : i32
    %11 = vector.broadcast %c16_i32_1 : i32 to vector<1x256xi32>
    %12 = arith.cmpi sge, %0, %11 : vector<1x256xi32>
    %13 = arith.andi %10, %12 : vector<1x256xi1>
    %true_2 = arith.constant true
    %14 = vector.broadcast %true_2 : i1 to vector<1x256xi1>
    %c16_i32_3 = arith.constant 16 : i32
    %15 = vector.broadcast %c16_i32_3 : i32 to vector<1x256xi32>
    %16 = arith.cmpi sge, %0, %15 : vector<1x256xi32>
    %17 = arith.andi %14, %16 : vector<1x256xi1>
    %c15_i32_4 = arith.constant 15 : i32
    %18 = vector.broadcast %c15_i32_4 : i32 to vector<1x256xi32>
    %19 = arith.cmpi slt, %2, %18 : vector<1x256xi32>
    %20 = arith.andi %17, %19 : vector<1x256xi1>
    %true_5 = arith.constant true
    %21 = vector.broadcast %true_5 : i1 to vector<1x256xi1>
    %c0_i32_6 = arith.constant 0 : i32
    %22 = vector.broadcast %c0_i32_6 : i32 to vector<1x256xi32>
    %23 = arith.cmpi sgt, %2, %22 : vector<1x256xi32>
    %24 = arith.andi %21, %23 : vector<1x256xi1>
    %true_7 = arith.constant true
    %25 = vector.broadcast %true_7 : i1 to vector<1x256xi1>
    %true_8 = arith.constant true
    %26 = vector.broadcast %true_8 : i1 to vector<1x256xi1>
    %c15_i32_9 = arith.constant 15 : i32
    %27 = vector.broadcast %c15_i32_9 : i32 to vector<1x256xi32>
    %28 = arith.cmpi slt, %2, %27 : vector<1x256xi32>
    %29 = arith.andi %26, %28 : vector<1x256xi1>
    %true_10 = arith.constant true
    %30 = vector.broadcast %true_10 : i1 to vector<1x256xi1>
    %c240_i32 = arith.constant 240 : i32
    %31 = vector.broadcast %c240_i32 : i32 to vector<1x256xi32>
    %32 = arith.cmpi slt, %0, %31 : vector<1x256xi32>
    %33 = arith.andi %30, %32 : vector<1x256xi1>
    %c0_i32_11 = arith.constant 0 : i32
    %34 = vector.broadcast %c0_i32_11 : i32 to vector<1x256xi32>
    %35 = arith.cmpi sgt, %2, %34 : vector<1x256xi32>
    %36 = arith.andi %33, %35 : vector<1x256xi1>
    %true_12 = arith.constant true
    %37 = vector.broadcast %true_12 : i1 to vector<1x256xi1>
    %c240_i32_13 = arith.constant 240 : i32
    %38 = vector.broadcast %c240_i32_13 : i32 to vector<1x256xi32>
    %39 = arith.cmpi slt, %0, %38 : vector<1x256xi32>
    %40 = arith.andi %37, %39 : vector<1x256xi1>
    %true_14 = arith.constant true
    %41 = vector.broadcast %true_14 : i1 to vector<1x256xi1>
    %c240_i32_15 = arith.constant 240 : i32
    %42 = vector.broadcast %c240_i32_15 : i32 to vector<1x256xi32>
    %43 = arith.cmpi slt, %0, %42 : vector<1x256xi32>
    %44 = arith.andi %41, %43 : vector<1x256xi1>
    %c15_i32_16 = arith.constant 15 : i32
    %45 = vector.broadcast %c15_i32_16 : i32 to vector<1x256xi32>
    %46 = arith.cmpi slt, %2, %45 : vector<1x256xi32>
    %47 = arith.andi %44, %46 : vector<1x256xi1>
    %c0 = arith.constant 0 : index
    %c0_17 = arith.constant 0 : index
    %48 = vector.load %arg2[%c0, %c0_17] : memref<2x256xf32, #tpu.memory_space<vmem>>, vector<2x256xf32>
    %c17_i32 = arith.constant 17 : i32
    %49 = tpu.dynamic_rotate %48 by %c17_i32 dim 1 : vector<2x256xf32>, i32 -> vector<2x256xf32>
    %cst = arith.constant 0xFF800000 : f32
    %50 = vector.shape_cast %9 : vector<1x256xi1> to vector<1x256xi1>
    %51 = vector.broadcast %50 : vector<1x256xi1> to vector<2x256xi1>
    %52 = vector.broadcast %cst : f32 to vector<2x256xf32>
    %53 = arith.select %51, %49, %52 : vector<2x256xi1>, vector<2x256xf32>
    %54 = arith.maximumf %48, %53 : vector<2x256xf32>
    %c16_i32_18 = arith.constant 16 : i32
    %55 = tpu.dynamic_rotate %48 by %c16_i32_18 dim 1 : vector<2x256xf32>, i32 -> vector<2x256xf32>
    %cst_19 = arith.constant 0xFF800000 : f32
    %56 = vector.shape_cast %13 : vector<1x256xi1> to vector<1x256xi1>
    %57 = vector.broadcast %56 : vector<1x256xi1> to vector<2x256xi1>
    %58 = vector.broadcast %cst_19 : f32 to vector<2x256xf32>
    %59 = arith.select %57, %55, %58 : vector<2x256xi1>, vector<2x256xf32>
    %60 = arith.maximumf %54, %59 : vector<2x256xf32>
    %c15_i32_20 = arith.constant 15 : i32
    %61 = tpu.dynamic_rotate %48 by %c15_i32_20 dim 1 : vector<2x256xf32>, i32 -> vector<2x256xf32>
    %cst_21 = arith.constant 0xFF800000 : f32
    %62 = vector.shape_cast %20 : vector<1x256xi1> to vector<1x256xi1>
    %63 = vector.broadcast %62 : vector<1x256xi1> to vector<2x256xi1>
    %64 = vector.broadcast %cst_21 : f32 to vector<2x256xf32>
    %65 = arith.select %63, %61, %64 : vector<2x256xi1>, vector<2x256xf32>
    %66 = arith.maximumf %60, %65 : vector<2x256xf32>
    %c1_i32 = arith.constant 1 : i32
    %67 = tpu.dynamic_rotate %48 by %c1_i32 dim 1 : vector<2x256xf32>, i32 -> vector<2x256xf32>
    %cst_22 = arith.constant 0xFF800000 : f32
    %68 = vector.shape_cast %24 : vector<1x256xi1> to vector<1x256xi1>
    %69 = vector.broadcast %68 : vector<1x256xi1> to vector<2x256xi1>
    %70 = vector.broadcast %cst_22 : f32 to vector<2x256xf32>
    %71 = arith.select %69, %67, %70 : vector<2x256xi1>, vector<2x256xf32>
    %72 = arith.maximumf %66, %71 : vector<2x256xf32>
    %c255_i32 = arith.constant 255 : i32
    %73 = tpu.dynamic_rotate %48 by %c255_i32 dim 1 : vector<2x256xf32>, i32 -> vector<2x256xf32>
    %cst_23 = arith.constant 0xFF800000 : f32
    %74 = vector.shape_cast %29 : vector<1x256xi1> to vector<1x256xi1>
    %75 = vector.broadcast %74 : vector<1x256xi1> to vector<2x256xi1>
    %76 = vector.broadcast %cst_23 : f32 to vector<2x256xf32>
    %77 = arith.select %75, %73, %76 : vector<2x256xi1>, vector<2x256xf32>
    %78 = arith.maximumf %72, %77 : vector<2x256xf32>
    %c241_i32 = arith.constant 241 : i32
    %79 = tpu.dynamic_rotate %48 by %c241_i32 dim 1 : vector<2x256xf32>, i32 -> vector<2x256xf32>
    %cst_24 = arith.constant 0xFF800000 : f32
    %80 = vector.shape_cast %36 : vector<1x256xi1> to vector<1x256xi1>
    %81 = vector.broadcast %80 : vector<1x256xi1> to vector<2x256xi1>
    %82 = vector.broadcast %cst_24 : f32 to vector<2x256xf32>
    %83 = arith.select %81, %79, %82 : vector<2x256xi1>, vector<2x256xf32>
    %84 = arith.maximumf %78, %83 : vector<2x256xf32>
    %c240_i32_25 = arith.constant 240 : i32
    %85 = tpu.dynamic_rotate %48 by %c240_i32_25 dim 1 : vector<2x256xf32>, i32 -> vector<2x256xf32>
    %cst_26 = arith.constant 0xFF800000 : f32
    %86 = vector.shape_cast %40 : vector<1x256xi1> to vector<1x256xi1>
    %87 = vector.broadcast %86 : vector<1x256xi1> to vector<2x256xi1>
    %88 = vector.broadcast %cst_26 : f32 to vector<2x256xf32>
    %89 = arith.select %87, %85, %88 : vector<2x256xi1>, vector<2x256xf32>
    %90 = arith.maximumf %84, %89 : vector<2x256xf32>
    %c239_i32 = arith.constant 239 : i32
    %91 = tpu.dynamic_rotate %48 by %c239_i32 dim 1 : vector<2x256xf32>, i32 -> vector<2x256xf32>
    %cst_27 = arith.constant 0xFF800000 : f32
    %92 = vector.shape_cast %47 : vector<1x256xi1> to vector<1x256xi1>
    %93 = vector.broadcast %92 : vector<1x256xi1> to vector<2x256xi1>
    %94 = vector.broadcast %cst_27 : f32 to vector<2x256xf32>
    %95 = arith.select %93, %91, %94 : vector<2x256xi1>, vector<2x256xf32>
    %96 = arith.maximumf %90, %95 : vector<2x256xf32>
    %c0_i32_28 = arith.constant 0 : i32
    %97 = vector.broadcast %c0_i32_28 : i32 to vector<2x256xi32>
    %cst_29 = arith.constant 9.99999997E-7 : f32
    %98 = vector.broadcast %cst_29 : f32 to vector<2x256xf32>
    %99 = arith.cmpf ogt, %96, %98 : vector<2x256xf32>
    %c255_i32_30 = arith.constant 255 : i32
    %100 = vector.broadcast %c255_i32_30 : i32 to vector<2x256xi32>
    %101 = arith.select %99, %100, %97 : vector<2x256xi1>, vector<2x256xi32>
    %cst_31 = arith.constant 9.99999997E-7 : f32
    %102 = vector.broadcast %cst_31 : f32 to vector<2x256xf32>
    %103 = arith.cmpf ogt, %48, %102 : vector<2x256xf32>
    %c1_i32_32 = arith.constant 1 : i32
    %104 = vector.broadcast %c1_i32_32 : i32 to vector<2x256xi32>
    %105 = arith.select %103, %104, %101 : vector<2x256xi1>, vector<2x256xi32>
    %c0_33 = arith.constant 0 : index
    %c0_34 = arith.constant 0 : index
    %106 = vector.load %arg8[%c0_33, %c0_34] : memref<2x256xi32, #tpu.memory_space<vmem>>, vector<2x256xi32>
    tpu.vector_store %arg8[%c0_33, %c0_34], %105 {strides = array<i32>} : memref<2x256xi32, #tpu.memory_space<vmem>>, vector<2x256xi32>,
    %cst_35 = arith.constant 0.000000e+00 : f32
    %107 = vector.broadcast %cst_35 : f32 to vector<8x256xf32>
    %c0_36 = arith.constant 0 : index
    %c0_37 = arith.constant 0 : index
    %108 = vector.load %arg11[%c0_36, %c0_37] : memref<8x256xf32, #tpu.memory_space<vmem>>, vector<8x256xf32>
    tpu.vector_store %arg11[%c0_36, %c0_37], %107 {strides = array<i32>} : memref<8x256xf32, #tpu.memory_space<vmem>>, vector<8x256xf32>,
    %cst_38 = arith.constant 1.000000e+00 : f32
    %109 = vector.broadcast %cst_38 : f32 to vector<1x256xf32>
    %c0_39 = arith.constant 0 : index
    %c0_40 = arith.constant 0 : index
    %c0_41 = arith.constant 0 : index
    %110 = vector.load %arg1[%c0_39, %c0_40, %c0_41] : memref<2x4x256xf32, #tpu.memory_space<vmem>>, vector<1x4x256xf32>
    %111 = vector.shape_cast %110 : vector<1x4x256xf32> to vector<4x256xf32>
    %c0_42 = arith.constant 0 : index
    %c0_43 = arith.constant 0 : index
    %112 = vector.load %arg11[%c0_42, %c0_43] : memref<8x256xf32, #tpu.memory_space<vmem>>, vector<4x256xf32>
    tpu.vector_store %arg11[%c0_42, %c0_43], %111 {strides = array<i32>} : memref<8x256xf32, #tpu.memory_space<vmem>>, vector<4x256xf32>,
    %c0_44 = arith.constant 0 : index
    %c0_45 = arith.constant 0 : index
    %113 = memref.load %arg0[%c0_44, %c0_45] : memref<3x2xf32, #tpu.memory_space<smem>>
    %114 = vector.broadcast %113 : f32 to vector<1x256xf32>
    %115 = arith.mulf %109, %114 : vector<1x256xf32>
    %c4 = arith.constant 4 : index
    %c0_46 = arith.constant 0 : index
    %116 = vector.load %arg11[%c4, %c0_46] : memref<8x256xf32, #tpu.memory_space<vmem>>, vector<1x256xf32>
    tpu.vector_store %arg11[%c4, %c0_46], %115 {strides = array<i32>} : memref<8x256xf32, #tpu.memory_space<vmem>>, vector<1x256xf32>,
    %c1 = arith.constant 1 : index
    %c0_47 = arith.constant 0 : index
    %117 = memref.load %arg0[%c1, %c0_47] : memref<3x2xf32, #tpu.memory_space<smem>>
    %118 = vector.broadcast %117 : f32 to vector<1x256xf32>
    %119 = arith.mulf %109, %118 : vector<1x256xf32>
    %c5 = arith.constant 5 : index
    %c0_48 = arith.constant 0 : index
    %120 = vector.load %arg11[%c5, %c0_48] : memref<8x256xf32, #tpu.memory_space<vmem>>, vector<1x256xf32>
    tpu.vector_store %arg11[%c5, %c0_48], %119 {strides = array<i32>} : memref<8x256xf32, #tpu.memory_space<vmem>>, vector<1x256xf32>,
    %c2 = arith.constant 2 : index
    %c0_49 = arith.constant 0 : index
    %121 = memref.load %arg0[%c2, %c0_49] : memref<3x2xf32, #tpu.memory_space<smem>>
    %122 = vector.broadcast %121 : f32 to vector<1x256xf32>
    %123 = arith.mulf %109, %122 : vector<1x256xf32>
    %c6 = arith.constant 6 : index
    %c0_50 = arith.constant 0 : index
    %124 = vector.load %arg11[%c6, %c0_50] : memref<8x256xf32, #tpu.memory_space<vmem>>, vector<1x256xf32>
    tpu.vector_store %arg11[%c6, %c0_50], %123 {strides = array<i32>} : memref<8x256xf32, #tpu.memory_space<vmem>>, vector<1x256xf32>,
    %c0_51 = arith.constant 0 : index
    %c0_52 = arith.constant 0 : index
    %125 = vector.load %arg11[%c0_51, %c0_52] : memref<8x256xf32, #tpu.memory_space<vmem>>, vector<8x256xf32>
    %cst_53 = arith.constant 0.000000e+00 : f32
    %126 = vector.broadcast %cst_53 : f32 to vector<8x256xf32>
    %c17_i32_54 = arith.constant 17 : i32
    %127 = tpu.dynamic_rotate %125 by %c17_i32_54 dim 1 : vector<8x256xf32>, i32 -> vector<8x256xf32>
    %cst_55 = arith.constant 0.000000e+00 : f32
    %128 = vector.shape_cast %9 : vector<1x256xi1> to vector<1x256xi1>
    %129 = vector.broadcast %128 : vector<1x256xi1> to vector<8x256xi1>
    %130 = vector.broadcast %cst_55 : f32 to vector<8x256xf32>
    %131 = arith.select %129, %127, %130 : vector<8x256xi1>, vector<8x256xf32>
    %c0_56 = arith.constant 0 : index
    %c0_57 = arith.constant 0 : index
    %c0_58 = arith.constant 0 : index
    %132 = vector.load %arg3[%c0_56, %c0_57, %c0_58] : memref<9x8x8xf32, #tpu.memory_space<vmem>>, vector<1x8x8xf32>
    %133 = vector.shape_cast %132 : vector<1x8x8xf32> to vector<8x8xf32>
    %cst_59 = arith.constant dense<0.000000e+00> : vector<8x256xf32>
    %134 = tpu.matmul %133, %131, %cst_59 {dimension_numbers = #tpu.dot_dimension_numbers<[1], [0], [0], [1], [0, 0, 1, 1], [], []>} : vector<8x8xf32>, vector<8x256xf32>, vector<8x256xf32> -> vector<8x256xf32>
    %135 = arith.addf %126, %134 : vector<8x256xf32>
    %c16_i32_60 = arith.constant 16 : i32
    %136 = tpu.dynamic_rotate %125 by %c16_i32_60 dim 1 : vector<8x256xf32>, i32 -> vector<8x256xf32>
    %cst_61 = arith.constant 0.000000e+00 : f32
    %137 = vector.shape_cast %13 : vector<1x256xi1> to vector<1x256xi1>
    %138 = vector.broadcast %137 : vector<1x256xi1> to vector<8x256xi1>
    %139 = vector.broadcast %cst_61 : f32 to vector<8x256xf32>
    %140 = arith.select %138, %136, %139 : vector<8x256xi1>, vector<8x256xf32>
    %c1_62 = arith.constant 1 : index
    %c0_63 = arith.constant 0 : index
    %c0_64 = arith.constant 0 : index
    %141 = vector.load %arg3[%c1_62, %c0_63, %c0_64] : memref<9x8x8xf32, #tpu.memory_space<vmem>>, vector<1x8x8xf32>
    %142 = vector.shape_cast %141 : vector<1x8x8xf32> to vector<8x8xf32>
    %cst_65 = arith.constant dense<0.000000e+00> : vector<8x256xf32>
    %143 = tpu.matmul %142, %140, %cst_65 {dimension_numbers = #tpu.dot_dimension_numbers<[1], [0], [0], [1], [0, 0, 1, 1], [], []>} : vector<8x8xf32>, vector<8x256xf32>, vector<8x256xf32> -> vector<8x256xf32>
    %144 = arith.addf %135, %143 : vector<8x256xf32>
    %c15_i32_66 = arith.constant 15 : i32
    %145 = tpu.dynamic_rotate %125 by %c15_i32_66 dim 1 : vector<8x256xf32>, i32 -> vector<8x256xf32>
    %cst_67 = arith.constant 0.000000e+00 : f32
    %146 = vector.shape_cast %20 : vector<1x256xi1> to vector<1x256xi1>
    %147 = vector.broadcast %146 : vector<1x256xi1> to vector<8x256xi1>
    %148 = vector.broadcast %cst_67 : f32 to vector<8x256xf32>
    %149 = arith.select %147, %145, %148 : vector<8x256xi1>, vector<8x256xf32>
    %c2_68 = arith.constant 2 : index
    %c0_69 = arith.constant 0 : index
    %c0_70 = arith.constant 0 : index
    %150 = vector.load %arg3[%c2_68, %c0_69, %c0_70] : memref<9x8x8xf32, #tpu.memory_space<vmem>>, vector<1x8x8xf32>
    %151 = vector.shape_cast %150 : vector<1x8x8xf32> to vector<8x8xf32>
    %cst_71 = arith.constant dense<0.000000e+00> : vector<8x256xf32>
    %152 = tpu.matmul %151, %149, %cst_71 {dimension_numbers = #tpu.dot_dimension_numbers<[1], [0], [0], [1], [0, 0, 1, 1], [], []>} : vector<8x8xf32>, vector<8x256xf32>, vector<8x256xf32> -> vector<8x256xf32>
    %153 = arith.addf %144, %152 : vector<8x256xf32>
    %c1_i32_72 = arith.constant 1 : i32
    %154 = tpu.dynamic_rotate %125 by %c1_i32_72 dim 1 : vector<8x256xf32>, i32 -> vector<8x256xf32>
    %cst_73 = arith.constant 0.000000e+00 : f32
    %155 = vector.shape_cast %24 : vector<1x256xi1> to vector<1x256xi1>
    %156 = vector.broadcast %155 : vector<1x256xi1> to vector<8x256xi1>
    %157 = vector.broadcast %cst_73 : f32 to vector<8x256xf32>
    %158 = arith.select %156, %154, %157 : vector<8x256xi1>, vector<8x256xf32>
    %c3 = arith.constant 3 : index
    %c0_74 = arith.constant 0 : index
    %c0_75 = arith.constant 0 : index
    %159 = vector.load %arg3[%c3, %c0_74, %c0_75] : memref<9x8x8xf32, #tpu.memory_space<vmem>>, vector<1x8x8xf32>
    %160 = vector.shape_cast %159 : vector<1x8x8xf32> to vector<8x8xf32>
    %cst_76 = arith.constant dense<0.000000e+00> : vector<8x256xf32>
    %161 = tpu.matmul %160, %158, %cst_76 {dimension_numbers = #tpu.dot_dimension_numbers<[1], [0], [0], [1], [0, 0, 1, 1], [], []>} : vector<8x8xf32>, vector<8x256xf32>, vector<8x256xf32> -> vector<8x256xf32>
    %162 = arith.addf %153, %161 : vector<8x256xf32>
    %cst_77 = arith.constant 0.000000e+00 : f32
    %163 = vector.shape_cast %25 : vector<1x256xi1> to vector<1x256xi1>
    %164 = vector.broadcast %163 : vector<1x256xi1> to vector<8x256xi1>
    %165 = vector.broadcast %cst_77 : f32 to vector<8x256xf32>
    %166 = arith.select %164, %125, %165 : vector<8x256xi1>, vector<8x256xf32>
    %c4_78 = arith.constant 4 : index
    %c0_79 = arith.constant 0 : index
    %c0_80 = arith.constant 0 : index
    %167 = vector.load %arg3[%c4_78, %c0_79, %c0_80] : memref<9x8x8xf32, #tpu.memory_space<vmem>>, vector<1x8x8xf32>
    %168 = vector.shape_cast %167 : vector<1x8x8xf32> to vector<8x8xf32>
    %cst_81 = arith.constant dense<0.000000e+00> : vector<8x256xf32>
    %169 = tpu.matmul %168, %166, %cst_81 {dimension_numbers = #tpu.dot_dimension_numbers<[1], [0], [0], [1], [0, 0, 1, 1], [], []>} : vector<8x8xf32>, vector<8x256xf32>, vector<8x256xf32> -> vector<8x256xf32>
    %170 = arith.addf %162, %169 : vector<8x256xf32>
    %c255_i32_82 = arith.constant 255 : i32
    %171 = tpu.dynamic_rotate %125 by %c255_i32_82 dim 1 : vector<8x256xf32>, i32 -> vector<8x256xf32>
    %cst_83 = arith.constant 0.000000e+00 : f32
    %172 = vector.shape_cast %29 : vector<1x256xi1> to vector<1x256xi1>
    %173 = vector.broadcast %172 : vector<1x256xi1> to vector<8x256xi1>
    %174 = vector.broadcast %cst_83 : f32 to vector<8x256xf32>
    %175 = arith.select %173, %171, %174 : vector<8x256xi1>, vector<8x256xf32>
    %c5_84 = arith.constant 5 : index
    %c0_85 = arith.constant 0 : index
    %c0_86 = arith.constant 0 : index
    %176 = vector.load %arg3[%c5_84, %c0_85, %c0_86] : memref<9x8x8xf32, #tpu.memory_space<vmem>>, vector<1x8x8xf32>
    %177 = vector.shape_cast %176 : vector<1x8x8xf32> to vector<8x8xf32>
    %cst_87 = arith.constant dense<0.000000e+00> : vector<8x256xf32>
    %178 = tpu.matmul %177, %175, %cst_87 {dimension_numbers = #tpu.dot_dimension_numbers<[1], [0], [0], [1], [0, 0, 1, 1], [], []>} : vector<8x8xf32>, vector<8x256xf32>, vector<8x256xf32> -> vector<8x256xf32>
    %179 = arith.addf %170, %178 : vector<8x256xf32>
    %c241_i32_88 = arith.constant 241 : i32
    %180 = tpu.dynamic_rotate %125 by %c241_i32_88 dim 1 : vector<8x256xf32>, i32 -> vector<8x256xf32>
    %cst_89 = arith.constant 0.000000e+00 : f32
    %181 = vector.shape_cast %36 : vector<1x256xi1> to vector<1x256xi1>
    %182 = vector.broadcast %181 : vector<1x256xi1> to vector<8x256xi1>
    %183 = vector.broadcast %cst_89 : f32 to vector<8x256xf32>
    %184 = arith.select %182, %180, %183 : vector<8x256xi1>, vector<8x256xf32>
    %c6_90 = arith.constant 6 : index
    %c0_91 = arith.constant 0 : index
    %c0_92 = arith.constant 0 : index
    %185 = vector.load %arg3[%c6_90, %c0_91, %c0_92] : memref<9x8x8xf32, #tpu.memory_space<vmem>>, vector<1x8x8xf32>
    %186 = vector.shape_cast %185 : vector<1x8x8xf32> to vector<8x8xf32>
    %cst_93 = arith.constant dense<0.000000e+00> : vector<8x256xf32>
    %187 = tpu.matmul %186, %184, %cst_93 {dimension_numbers = #tpu.dot_dimension_numbers<[1], [0], [0], [1], [0, 0, 1, 1], [], []>} : vector<8x8xf32>, vector<8x256xf32>, vector<8x256xf32> -> vector<8x256xf32>
    %188 = arith.addf %179, %187 : vector<8x256xf32>
    %c240_i32_94 = arith.constant 240 : i32
    %189 = tpu.dynamic_rotate %125 by %c240_i32_94 dim 1 : vector<8x256xf32>, i32 -> vector<8x256xf32>
    %cst_95 = arith.constant 0.000000e+00 : f32
    %190 = vector.shape_cast %40 : vector<1x256xi1> to vector<1x256xi1>
    %191 = vector.broadcast %190 : vector<1x256xi1> to vector<8x256xi1>
    %192 = vector.broadcast %cst_95 : f32 to vector<8x256xf32>
    %193 = arith.select %191, %189, %192 : vector<8x256xi1>, vector<8x256xf32>
    %c7 = arith.constant 7 : index
    %c0_96 = arith.constant 0 : index
    %c0_97 = arith.constant 0 : index
    %194 = vector.load %arg3[%c7, %c0_96, %c0_97] : memref<9x8x8xf32, #tpu.memory_space<vmem>>, vector<1x8x8xf32>
    %195 = vector.shape_cast %194 : vector<1x8x8xf32> to vector<8x8xf32>
    %cst_98 = arith.constant dense<0.000000e+00> : vector<8x256xf32>
    %196 = tpu.matmul %195, %193, %cst_98 {dimension_numbers = #tpu.dot_dimension_numbers<[1], [0], [0], [1], [0, 0, 1, 1], [], []>} : vector<8x8xf32>, vector<8x256xf32>, vector<8x256xf32> -> vector<8x256xf32>
    %197 = arith.addf %188, %196 : vector<8x256xf32>
    %c239_i32_99 = arith.constant 239 : i32
    %198 = tpu.dynamic_rotate %125 by %c239_i32_99 dim 1 : vector<8x256xf32>, i32 -> vector<8x256xf32>
    %cst_100 = arith.constant 0.000000e+00 : f32
    %199 = vector.shape_cast %47 : vector<1x256xi1> to vector<1x256xi1>
    %200 = vector.broadcast %199 : vector<1x256xi1> to vector<8x256xi1>
    %201 = vector.broadcast %cst_100 : f32 to vector<8x256xf32>
    %202 = arith.select %200, %198, %201 : vector<8x256xi1>, vector<8x256xf32>
    %c8 = arith.constant 8 : index
    %c0_101 = arith.constant 0 : index
    %c0_102 = arith.constant 0 : index
    %203 = vector.load %arg3[%c8, %c0_101, %c0_102] : memref<9x8x8xf32, #tpu.memory_space<vmem>>, vector<1x8x8xf32>
    %204 = vector.shape_cast %203 : vector<1x8x8xf32> to vector<8x8xf32>
    %cst_103 = arith.constant dense<0.000000e+00> : vector<8x256xf32>
    %205 = tpu.matmul %204, %202, %cst_103 {dimension_numbers = #tpu.dot_dimension_numbers<[1], [0], [0], [1], [0, 0, 1, 1], [], []>} : vector<8x8xf32>, vector<8x256xf32>, vector<8x256xf32> -> vector<8x256xf32>
    %206 = arith.addf %197, %205 : vector<8x256xf32>
    %c0_104 = arith.constant 0 : index
    %c0_105 = arith.constant 0 : index
    %207 = vector.load %arg4[%c0_104, %c0_105] : memref<8x1xf32, #tpu.memory_space<vmem>>, vector<8x1xf32>
    %208 = vector.broadcast %207 : vector<8x1xf32> to vector<8x256xf32>
    %209 = arith.addf %206, %208 : vector<8x256xf32>
    %cst_106 = arith.constant 0.000000e+00 : f32
    %210 = vector.broadcast %cst_106 : f32 to vector<8x256xf32>
    %211 = arith.maximumf %209, %210 : vector<8x256xf32>
    %c0_107 = arith.constant 0 : index
    %c0_108 = arith.constant 0 : index
    %212 = vector.load %arg5[%c0_107, %c0_108] : memref<2x8xf32, #tpu.memory_space<vmem>>, vector<2x8xf32>
    %cst_109 = arith.constant dense<0.000000e+00> : vector<2x256xf32>
    %213 = tpu.matmul %212, %211, %cst_109 {dimension_numbers = #tpu.dot_dimension_numbers<[1], [0], [0], [1], [0, 0, 1, 1], [], []>} : vector<2x8xf32>, vector<8x256xf32>, vector<2x256xf32> -> vector<2x256xf32>
    %c0_110 = arith.constant 0 : index
    %c0_111 = arith.constant 0 : index
    %214 = vector.load %arg6[%c0_110, %c0_111] : memref<2x1xf32, #tpu.memory_space<vmem>>, vector<2x1xf32>
    %215 = vector.broadcast %214 : vector<2x1xf32> to vector<2x256xf32>
    %216 = arith.addf %213, %215 : vector<2x256xf32>
    %c0_112 = arith.constant 0 : index
    %c0_113 = arith.constant 0 : index
    %c0_114 = arith.constant 0 : index
    %217 = vector.load %arg7[%c0_112, %c0_113, %c0_114] : memref<2x2x256xf32, #tpu.memory_space<vmem>>, vector<1x2x256xf32>
    %218 = vector.shape_cast %217 : vector<1x2x256xf32> to vector<2x256xf32>
    %219 = vector.shape_cast %216 : vector<2x256xf32> to vector<1x2x256xf32>
    tpu.vector_store %arg7[%c0_112, %c0_113, %c0_114], %219 {strides = array<i32>} : memref<2x2x256xf32, #tpu.memory_space<vmem>>, vector<1x2x256xf32>,
    %220 = vector.extract_strided_slice %216 {offsets = [0, 0], sizes = [1, 256], strides = [1, 1]} : vector<2x256xf32> to vector<1x256xf32>
    %221 = vector.extract_strided_slice %216 {offsets = [1, 0], sizes = [1, 256], strides = [1, 1]} : vector<2x256xf32> to vector<1x256xf32>
    %222 = vector.extract_strided_slice %105 {offsets = [0, 0], sizes = [1, 256], strides = [1, 1]} : vector<2x256xi32> to vector<1x256xi32>
    %223 = arith.maximumf %220, %221 : vector<1x256xf32>
    %224 = arith.subf %220, %223 : vector<1x256xf32>
    %225 = math.exp %224 : vector<1x256xf32>
    %226 = arith.subf %221, %223 : vector<1x256xf32>
    %227 = math.exp %226 : vector<1x256xf32>
    %228 = arith.addf %225, %227 : vector<1x256xf32>
    %229 = math.log %228 : vector<1x256xf32>
    %230 = arith.addf %223, %229 : vector<1x256xf32>
    %c1_i32_115 = arith.constant 1 : i32
    %231 = vector.broadcast %c1_i32_115 : i32 to vector<1x256xi32>
    %232 = arith.cmpi eq, %222, %231 : vector<1x256xi32>
    %233 = arith.select %232, %221, %220 : vector<1x256xi1>, vector<1x256xf32>
    %c255_i32_116 = arith.constant 255 : i32
    %234 = vector.broadcast %c255_i32_116 : i32 to vector<1x256xi32>
    %235 = arith.cmpi ne, %222, %234 : vector<1x256xi32>
    %236 = arith.extui %235 : vector<1x256xi1> to vector<1x256xi32>
    %237 = arith.sitofp %236 : vector<1x256xi32> to vector<1x256xf32>
    %238 = arith.subf %230, %233 : vector<1x256xf32>
    %239 = arith.mulf %238, %237 : vector<1x256xf32>
    %240 = vector.shape_cast %239 : vector<1x256xf32> to vector<1x1x256xf32>
    %cst_117 = arith.constant dense<0.000000e+00> : vector<1xf32>
    %241 = vector.multi_reduction <add>, %240, %cst_117 [1, 2] : vector<1x1x256xf32> to vector<1xf32>
    %242 = vector.shape_cast %241 : vector<1xf32> to vector<1x1x1xf32>
    %243 = vector.extract %242[0, 0, 0] : f32 from vector<1x1x1xf32>
    %cst_118 = arith.constant 0.000000e+00 : f32
    %244 = arith.addf %cst_118, %243 : f32
    %245 = vector.shape_cast %237 : vector<1x256xf32> to vector<1x1x256xf32>
    %cst_119 = arith.constant dense<0.000000e+00> : vector<1xf32>
    %246 = vector.multi_reduction <add>, %245, %cst_119 [1, 2] : vector<1x1x256xf32> to vector<1xf32>
    %247 = vector.shape_cast %246 : vector<1xf32> to vector<1x1x1xf32>
    %248 = vector.extract %247[0, 0, 0] : f32 from vector<1x1x1xf32>
    %cst_120 = arith.constant 0.000000e+00 : f32
    %249 = arith.addf %cst_120, %248 : f32
    %250 = arith.cmpf ogt, %221, %220 : vector<1x256xf32>
    %c1_i32_121 = arith.constant 1 : i32
    %251 = vector.broadcast %c1_i32_121 : i32 to vector<1x256xi32>
    %252 = arith.cmpi eq, %222, %251 : vector<1x256xi32>
    %253 = arith.andi %250, %252 : vector<1x256xi1>
    %254 = arith.andi %253, %235 : vector<1x256xi1>
    %255 = arith.extui %254 : vector<1x256xi1> to vector<1x256xi32>
    %256 = arith.sitofp %255 : vector<1x256xi32> to vector<1x256xf32>
    %257 = vector.shape_cast %256 : vector<1x256xf32> to vector<1x1x256xf32>
    %cst_122 = arith.constant dense<0.000000e+00> : vector<1xf32>
    %258 = vector.multi_reduction <add>, %257, %cst_122 [1, 2] : vector<1x1x256xf32> to vector<1xf32>
    %259 = vector.shape_cast %258 : vector<1xf32> to vector<1x1x1xf32>
    %260 = vector.extract %259[0, 0, 0] : f32 from vector<1x1x1xf32>
    %cst_123 = arith.constant 0.000000e+00 : f32
    %261 = arith.addf %cst_123, %260 : f32
    %262 = arith.ori %250, %252 : vector<1x256xi1>
    %263 = arith.andi %262, %235 : vector<1x256xi1>
    %264 = arith.extui %263 : vector<1x256xi1> to vector<1x256xi32>
    %265 = arith.sitofp %264 : vector<1x256xi32> to vector<1x256xf32>
    %266 = vector.shape_cast %265 : vector<1x256xf32> to vector<1x1x256xf32>
    %cst_124 = arith.constant dense<0.000000e+00> : vector<1xf32>
    %267 = vector.multi_reduction <add>, %266, %cst_124 [1, 2] : vector<1x1x256xf32> to vector<1xf32>
    %268 = vector.shape_cast %267 : vector<1xf32> to vector<1x1x1xf32>
    %269 = vector.extract %268[0, 0, 0] : f32 from vector<1x1x1xf32>
    %cst_125 = arith.constant 0.000000e+00 : f32
    %270 = arith.addf %cst_125, %269 : f32
    %c1_126 = arith.constant 1 : index
    %c0_127 = arith.constant 0 : index
    %c0_128 = arith.constant 0 : index
    %271 = vector.load %arg1[%c1_126, %c0_127, %c0_128] : memref<2x4x256xf32, #tpu.memory_space<vmem>>, vector<1x4x256xf32>
    %272 = vector.shape_cast %271 : vector<1x4x256xf32> to vector<4x256xf32>
    %c0_129 = arith.constant 0 : index
    %c0_130 = arith.constant 0 : index
    %273 = vector.load %arg11[%c0_129, %c0_130] : memref<8x256xf32, #tpu.memory_space<vmem>>, vector<4x256xf32>
    tpu.vector_store %arg11[%c0_129, %c0_130], %272 {strides = array<i32>} : memref<8x256xf32, #tpu.memory_space<vmem>>, vector<4x256xf32>,
    %c0_131 = arith.constant 0 : index
    %c1_132 = arith.constant 1 : index
    %274 = memref.load %arg0[%c0_131, %c1_132] : memref<3x2xf32, #tpu.memory_space<smem>>
    %275 = vector.broadcast %274 : f32 to vector<1x256xf32>
    %276 = arith.mulf %109, %275 : vector<1x256xf32>
    %c4_133 = arith.constant 4 : index
    %c0_134 = arith.constant 0 : index
    %277 = vector.load %arg11[%c4_133, %c0_134] : memref<8x256xf32, #tpu.memory_space<vmem>>, vector<1x256xf32>
    tpu.vector_store %arg11[%c4_133, %c0_134], %276 {strides = array<i32>} : memref<8x256xf32, #tpu.memory_space<vmem>>, vector<1x256xf32>,
    %c1_135 = arith.constant 1 : index
    %c1_136 = arith.constant 1 : index
    %278 = memref.load %arg0[%c1_135, %c1_136] : memref<3x2xf32, #tpu.memory_space<smem>>
    %279 = vector.broadcast %278 : f32 to vector<1x256xf32>
    %280 = arith.mulf %109, %279 : vector<1x256xf32>
    %c5_137 = arith.constant 5 : index
    %c0_138 = arith.constant 0 : index
    %281 = vector.load %arg11[%c5_137, %c0_138] : memref<8x256xf32, #tpu.memory_space<vmem>>, vector<1x256xf32>
    tpu.vector_store %arg11[%c5_137, %c0_138], %280 {strides = array<i32>} : memref<8x256xf32, #tpu.memory_space<vmem>>, vector<1x256xf32>,
    %c2_139 = arith.constant 2 : index
    %c1_140 = arith.constant 1 : index
    %282 = memref.load %arg0[%c2_139, %c1_140] : memref<3x2xf32, #tpu.memory_space<smem>>
    %283 = vector.broadcast %282 : f32 to vector<1x256xf32>
    %284 = arith.mulf %109, %283 : vector<1x256xf32>
    %c6_141 = arith.constant 6 : index
    %c0_142 = arith.constant 0 : index
    %285 = vector.load %arg11[%c6_141, %c0_142] : memref<8x256xf32, #tpu.memory_space<vmem>>, vector<1x256xf32>
    tpu.vector_store %arg11[%c6_141, %c0_142], %284 {strides = array<i32>} : memref<8x256xf32, #tpu.memory_space<vmem>>, vector<1x256xf32>,
    %c0_143 = arith.constant 0 : index
    %c0_144 = arith.constant 0 : index
    %286 = vector.load %arg11[%c0_143, %c0_144] : memref<8x256xf32, #tpu.memory_space<vmem>>, vector<8x256xf32>
    %cst_145 = arith.constant 0.000000e+00 : f32
    %287 = vector.broadcast %cst_145 : f32 to vector<8x256xf32>
    %c17_i32_146 = arith.constant 17 : i32
    %288 = tpu.dynamic_rotate %286 by %c17_i32_146 dim 1 : vector<8x256xf32>, i32 -> vector<8x256xf32>
    %cst_147 = arith.constant 0.000000e+00 : f32
    %289 = vector.shape_cast %9 : vector<1x256xi1> to vector<1x256xi1>
    %290 = vector.broadcast %289 : vector<1x256xi1> to vector<8x256xi1>
    %291 = vector.broadcast %cst_147 : f32 to vector<8x256xf32>
    %292 = arith.select %290, %288, %291 : vector<8x256xi1>, vector<8x256xf32>
    %c0_148 = arith.constant 0 : index
    %c0_149 = arith.constant 0 : index
    %c0_150 = arith.constant 0 : index
    %293 = vector.load %arg3[%c0_148, %c0_149, %c0_150] : memref<9x8x8xf32, #tpu.memory_space<vmem>>, vector<1x8x8xf32>
    %294 = vector.shape_cast %293 : vector<1x8x8xf32> to vector<8x8xf32>
    %cst_151 = arith.constant dense<0.000000e+00> : vector<8x256xf32>
    %295 = tpu.matmul %294, %292, %cst_151 {dimension_numbers = #tpu.dot_dimension_numbers<[1], [0], [0], [1], [0, 0, 1, 1], [], []>} : vector<8x8xf32>, vector<8x256xf32>, vector<8x256xf32> -> vector<8x256xf32>
    %296 = arith.addf %287, %295 : vector<8x256xf32>
    %c16_i32_152 = arith.constant 16 : i32
    %297 = tpu.dynamic_rotate %286 by %c16_i32_152 dim 1 : vector<8x256xf32>, i32 -> vector<8x256xf32>
    %cst_153 = arith.constant 0.000000e+00 : f32
    %298 = vector.shape_cast %13 : vector<1x256xi1> to vector<1x256xi1>
    %299 = vector.broadcast %298 : vector<1x256xi1> to vector<8x256xi1>
    %300 = vector.broadcast %cst_153 : f32 to vector<8x256xf32>
    %301 = arith.select %299, %297, %300 : vector<8x256xi1>, vector<8x256xf32>
    %c1_154 = arith.constant 1 : index
    %c0_155 = arith.constant 0 : index
    %c0_156 = arith.constant 0 : index
    %302 = vector.load %arg3[%c1_154, %c0_155, %c0_156] : memref<9x8x8xf32, #tpu.memory_space<vmem>>, vector<1x8x8xf32>
    %303 = vector.shape_cast %302 : vector<1x8x8xf32> to vector<8x8xf32>
    %cst_157 = arith.constant dense<0.000000e+00> : vector<8x256xf32>
    %304 = tpu.matmul %303, %301, %cst_157 {dimension_numbers = #tpu.dot_dimension_numbers<[1], [0], [0], [1], [0, 0, 1, 1], [], []>} : vector<8x8xf32>, vector<8x256xf32>, vector<8x256xf32> -> vector<8x256xf32>
    %305 = arith.addf %296, %304 : vector<8x256xf32>
    %c15_i32_158 = arith.constant 15 : i32
    %306 = tpu.dynamic_rotate %286 by %c15_i32_158 dim 1 : vector<8x256xf32>, i32 -> vector<8x256xf32>
    %cst_159 = arith.constant 0.000000e+00 : f32
    %307 = vector.shape_cast %20 : vector<1x256xi1> to vector<1x256xi1>
    %308 = vector.broadcast %307 : vector<1x256xi1> to vector<8x256xi1>
    %309 = vector.broadcast %cst_159 : f32 to vector<8x256xf32>
    %310 = arith.select %308, %306, %309 : vector<8x256xi1>, vector<8x256xf32>
    %c2_160 = arith.constant 2 : index
    %c0_161 = arith.constant 0 : index
    %c0_162 = arith.constant 0 : index
    %311 = vector.load %arg3[%c2_160, %c0_161, %c0_162] : memref<9x8x8xf32, #tpu.memory_space<vmem>>, vector<1x8x8xf32>
    %312 = vector.shape_cast %311 : vector<1x8x8xf32> to vector<8x8xf32>
    %cst_163 = arith.constant dense<0.000000e+00> : vector<8x256xf32>
    %313 = tpu.matmul %312, %310, %cst_163 {dimension_numbers = #tpu.dot_dimension_numbers<[1], [0], [0], [1], [0, 0, 1, 1], [], []>} : vector<8x8xf32>, vector<8x256xf32>, vector<8x256xf32> -> vector<8x256xf32>
    %314 = arith.addf %305, %313 : vector<8x256xf32>
    %c1_i32_164 = arith.constant 1 : i32
    %315 = tpu.dynamic_rotate %286 by %c1_i32_164 dim 1 : vector<8x256xf32>, i32 -> vector<8x256xf32>
    %cst_165 = arith.constant 0.000000e+00 : f32
    %316 = vector.shape_cast %24 : vector<1x256xi1> to vector<1x256xi1>
    %317 = vector.broadcast %316 : vector<1x256xi1> to vector<8x256xi1>
    %318 = vector.broadcast %cst_165 : f32 to vector<8x256xf32>
    %319 = arith.select %317, %315, %318 : vector<8x256xi1>, vector<8x256xf32>
    %c3_166 = arith.constant 3 : index
    %c0_167 = arith.constant 0 : index
    %c0_168 = arith.constant 0 : index
    %320 = vector.load %arg3[%c3_166, %c0_167, %c0_168] : memref<9x8x8xf32, #tpu.memory_space<vmem>>, vector<1x8x8xf32>
    %321 = vector.shape_cast %320 : vector<1x8x8xf32> to vector<8x8xf32>
    %cst_169 = arith.constant dense<0.000000e+00> : vector<8x256xf32>
    %322 = tpu.matmul %321, %319, %cst_169 {dimension_numbers = #tpu.dot_dimension_numbers<[1], [0], [0], [1], [0, 0, 1, 1], [], []>} : vector<8x8xf32>, vector<8x256xf32>, vector<8x256xf32> -> vector<8x256xf32>
    %323 = arith.addf %314, %322 : vector<8x256xf32>
    %cst_170 = arith.constant 0.000000e+00 : f32
    %324 = vector.shape_cast %25 : vector<1x256xi1> to vector<1x256xi1>
    %325 = vector.broadcast %324 : vector<1x256xi1> to vector<8x256xi1>
    %326 = vector.broadcast %cst_170 : f32 to vector<8x256xf32>
    %327 = arith.select %325, %286, %326 : vector<8x256xi1>, vector<8x256xf32>
    %c4_171 = arith.constant 4 : index
    %c0_172 = arith.constant 0 : index
    %c0_173 = arith.constant 0 : index
    %328 = vector.load %arg3[%c4_171, %c0_172, %c0_173] : memref<9x8x8xf32, #tpu.memory_space<vmem>>, vector<1x8x8xf32>
    %329 = vector.shape_cast %328 : vector<1x8x8xf32> to vector<8x8xf32>
    %cst_174 = arith.constant dense<0.000000e+00> : vector<8x256xf32>
    %330 = tpu.matmul %329, %327, %cst_174 {dimension_numbers = #tpu.dot_dimension_numbers<[1], [0], [0], [1], [0, 0, 1, 1], [], []>} : vector<8x8xf32>, vector<8x256xf32>, vector<8x256xf32> -> vector<8x256xf32>
    %331 = arith.addf %323, %330 : vector<8x256xf32>
    %c255_i32_175 = arith.constant 255 : i32
    %332 = tpu.dynamic_rotate %286 by %c255_i32_175 dim 1 : vector<8x256xf32>, i32 -> vector<8x256xf32>
    %cst_176 = arith.constant 0.000000e+00 : f32
    %333 = vector.shape_cast %29 : vector<1x256xi1> to vector<1x256xi1>
    %334 = vector.broadcast %333 : vector<1x256xi1> to vector<8x256xi1>
    %335 = vector.broadcast %cst_176 : f32 to vector<8x256xf32>
    %336 = arith.select %334, %332, %335 : vector<8x256xi1>, vector<8x256xf32>
    %c5_177 = arith.constant 5 : index
    %c0_178 = arith.constant 0 : index
    %c0_179 = arith.constant 0 : index
    %337 = vector.load %arg3[%c5_177, %c0_178, %c0_179] : memref<9x8x8xf32, #tpu.memory_space<vmem>>, vector<1x8x8xf32>
    %338 = vector.shape_cast %337 : vector<1x8x8xf32> to vector<8x8xf32>
    %cst_180 = arith.constant dense<0.000000e+00> : vector<8x256xf32>
    %339 = tpu.matmul %338, %336, %cst_180 {dimension_numbers = #tpu.dot_dimension_numbers<[1], [0], [0], [1], [0, 0, 1, 1], [], []>} : vector<8x8xf32>, vector<8x256xf32>, vector<8x256xf32> -> vector<8x256xf32>
    %340 = arith.addf %331, %339 : vector<8x256xf32>
    %c241_i32_181 = arith.constant 241 : i32
    %341 = tpu.dynamic_rotate %286 by %c241_i32_181 dim 1 : vector<8x256xf32>, i32 -> vector<8x256xf32>
    %cst_182 = arith.constant 0.000000e+00 : f32
    %342 = vector.shape_cast %36 : vector<1x256xi1> to vector<1x256xi1>
    %343 = vector.broadcast %342 : vector<1x256xi1> to vector<8x256xi1>
    %344 = vector.broadcast %cst_182 : f32 to vector<8x256xf32>
    %345 = arith.select %343, %341, %344 : vector<8x256xi1>, vector<8x256xf32>
    %c6_183 = arith.constant 6 : index
    %c0_184 = arith.constant 0 : index
    %c0_185 = arith.constant 0 : index
    %346 = vector.load %arg3[%c6_183, %c0_184, %c0_185] : memref<9x8x8xf32, #tpu.memory_space<vmem>>, vector<1x8x8xf32>
    %347 = vector.shape_cast %346 : vector<1x8x8xf32> to vector<8x8xf32>
    %cst_186 = arith.constant dense<0.000000e+00> : vector<8x256xf32>
    %348 = tpu.matmul %347, %345, %cst_186 {dimension_numbers = #tpu.dot_dimension_numbers<[1], [0], [0], [1], [0, 0, 1, 1], [], []>} : vector<8x8xf32>, vector<8x256xf32>, vector<8x256xf32> -> vector<8x256xf32>
    %349 = arith.addf %340, %348 : vector<8x256xf32>
    %c240_i32_187 = arith.constant 240 : i32
    %350 = tpu.dynamic_rotate %286 by %c240_i32_187 dim 1 : vector<8x256xf32>, i32 -> vector<8x256xf32>
    %cst_188 = arith.constant 0.000000e+00 : f32
    %351 = vector.shape_cast %40 : vector<1x256xi1> to vector<1x256xi1>
    %352 = vector.broadcast %351 : vector<1x256xi1> to vector<8x256xi1>
    %353 = vector.broadcast %cst_188 : f32 to vector<8x256xf32>
    %354 = arith.select %352, %350, %353 : vector<8x256xi1>, vector<8x256xf32>
    %c7_189 = arith.constant 7 : index
    %c0_190 = arith.constant 0 : index
    %c0_191 = arith.constant 0 : index
    %355 = vector.load %arg3[%c7_189, %c0_190, %c0_191] : memref<9x8x8xf32, #tpu.memory_space<vmem>>, vector<1x8x8xf32>
    %356 = vector.shape_cast %355 : vector<1x8x8xf32> to vector<8x8xf32>
    %cst_192 = arith.constant dense<0.000000e+00> : vector<8x256xf32>
    %357 = tpu.matmul %356, %354, %cst_192 {dimension_numbers = #tpu.dot_dimension_numbers<[1], [0], [0], [1], [0, 0, 1, 1], [], []>} : vector<8x8xf32>, vector<8x256xf32>, vector<8x256xf32> -> vector<8x256xf32>
    %358 = arith.addf %349, %357 : vector<8x256xf32>
    %c239_i32_193 = arith.constant 239 : i32
    %359 = tpu.dynamic_rotate %286 by %c239_i32_193 dim 1 : vector<8x256xf32>, i32 -> vector<8x256xf32>
    %cst_194 = arith.constant 0.000000e+00 : f32
    %360 = vector.shape_cast %47 : vector<1x256xi1> to vector<1x256xi1>
    %361 = vector.broadcast %360 : vector<1x256xi1> to vector<8x256xi1>
    %362 = vector.broadcast %cst_194 : f32 to vector<8x256xf32>
    %363 = arith.select %361, %359, %362 : vector<8x256xi1>, vector<8x256xf32>
    %c8_195 = arith.constant 8 : index
    %c0_196 = arith.constant 0 : index
    %c0_197 = arith.constant 0 : index
    %364 = vector.load %arg3[%c8_195, %c0_196, %c0_197] : memref<9x8x8xf32, #tpu.memory_space<vmem>>, vector<1x8x8xf32>
    %365 = vector.shape_cast %364 : vector<1x8x8xf32> to vector<8x8xf32>
    %cst_198 = arith.constant dense<0.000000e+00> : vector<8x256xf32>
    %366 = tpu.matmul %365, %363, %cst_198 {dimension_numbers = #tpu.dot_dimension_numbers<[1], [0], [0], [1], [0, 0, 1, 1], [], []>} : vector<8x8xf32>, vector<8x256xf32>, vector<8x256xf32> -> vector<8x256xf32>
    %367 = arith.addf %358, %366 : vector<8x256xf32>
    %c0_199 = arith.constant 0 : index
    %c0_200 = arith.constant 0 : index
    %368 = vector.load %arg4[%c0_199, %c0_200] : memref<8x1xf32, #tpu.memory_space<vmem>>, vector<8x1xf32>
    %369 = vector.broadcast %368 : vector<8x1xf32> to vector<8x256xf32>
    %370 = arith.addf %367, %369 : vector<8x256xf32>
    %cst_201 = arith.constant 0.000000e+00 : f32
    %371 = vector.broadcast %cst_201 : f32 to vector<8x256xf32>
    %372 = arith.maximumf %370, %371 : vector<8x256xf32>
    %c0_202 = arith.constant 0 : index
    %c0_203 = arith.constant 0 : index
    %373 = vector.load %arg5[%c0_202, %c0_203] : memref<2x8xf32, #tpu.memory_space<vmem>>, vector<2x8xf32>
    %cst_204 = arith.constant dense<0.000000e+00> : vector<2x256xf32>
    %374 = tpu.matmul %373, %372, %cst_204 {dimension_numbers = #tpu.dot_dimension_numbers<[1], [0], [0], [1], [0, 0, 1, 1], [], []>} : vector<2x8xf32>, vector<8x256xf32>, vector<2x256xf32> -> vector<2x256xf32>
    %c0_205 = arith.constant 0 : index
    %c0_206 = arith.constant 0 : index
    %375 = vector.load %arg6[%c0_205, %c0_206] : memref<2x1xf32, #tpu.memory_space<vmem>>, vector<2x1xf32>
    %376 = vector.broadcast %375 : vector<2x1xf32> to vector<2x256xf32>
    %377 = arith.addf %374, %376 : vector<2x256xf32>
    %c1_207 = arith.constant 1 : index
    %c0_208 = arith.constant 0 : index
    %c0_209 = arith.constant 0 : index
    %378 = vector.load %arg7[%c1_207, %c0_208, %c0_209] : memref<2x2x256xf32, #tpu.memory_space<vmem>>, vector<1x2x256xf32>
    %379 = vector.shape_cast %378 : vector<1x2x256xf32> to vector<2x256xf32>
    %380 = vector.shape_cast %377 : vector<2x256xf32> to vector<1x2x256xf32>
    tpu.vector_store %arg7[%c1_207, %c0_208, %c0_209], %380 {strides = array<i32>} : memref<2x2x256xf32, #tpu.memory_space<vmem>>, vector<1x2x256xf32>,
    %381 = vector.extract_strided_slice %377 {offsets = [0, 0], sizes = [1, 256], strides = [1, 1]} : vector<2x256xf32> to vector<1x256xf32>
    %382 = vector.extract_strided_slice %377 {offsets = [1, 0], sizes = [1, 256], strides = [1, 1]} : vector<2x256xf32> to vector<1x256xf32>
    %383 = vector.extract_strided_slice %105 {offsets = [1, 0], sizes = [1, 256], strides = [1, 1]} : vector<2x256xi32> to vector<1x256xi32>
    %384 = arith.maximumf %381, %382 : vector<1x256xf32>
    %385 = arith.subf %381, %384 : vector<1x256xf32>
    %386 = math.exp %385 : vector<1x256xf32>
    %387 = arith.subf %382, %384 : vector<1x256xf32>
    %388 = math.exp %387 : vector<1x256xf32>
    %389 = arith.addf %386, %388 : vector<1x256xf32>
    %390 = math.log %389 : vector<1x256xf32>
    %391 = arith.addf %384, %390 : vector<1x256xf32>
    %c1_i32_210 = arith.constant 1 : i32
    %392 = vector.broadcast %c1_i32_210 : i32 to vector<1x256xi32>
    %393 = arith.cmpi eq, %383, %392 : vector<1x256xi32>
    %394 = arith.select %393, %382, %381 : vector<1x256xi1>, vector<1x256xf32>
    %c255_i32_211 = arith.constant 255 : i32
    %395 = vector.broadcast %c255_i32_211 : i32 to vector<1x256xi32>
    %396 = arith.cmpi ne, %383, %395 : vector<1x256xi32>
    %397 = arith.extui %396 : vector<1x256xi1> to vector<1x256xi32>
    %398 = arith.sitofp %397 : vector<1x256xi32> to vector<1x256xf32>
    %399 = arith.subf %391, %394 : vector<1x256xf32>
    %400 = arith.mulf %399, %398 : vector<1x256xf32>
    %401 = vector.shape_cast %400 : vector<1x256xf32> to vector<1x1x256xf32>
    %cst_212 = arith.constant dense<0.000000e+00> : vector<1xf32>
    %402 = vector.multi_reduction <add>, %401, %cst_212 [1, 2] : vector<1x1x256xf32> to vector<1xf32>
    %403 = vector.shape_cast %402 : vector<1xf32> to vector<1x1x1xf32>
    %404 = vector.extract %403[0, 0, 0] : f32 from vector<1x1x1xf32>
    %405 = arith.addf %244, %404 : f32
    %406 = vector.shape_cast %398 : vector<1x256xf32> to vector<1x1x256xf32>
    %cst_213 = arith.constant dense<0.000000e+00> : vector<1xf32>
    %407 = vector.multi_reduction <add>, %406, %cst_213 [1, 2] : vector<1x1x256xf32> to vector<1xf32>
    %408 = vector.shape_cast %407 : vector<1xf32> to vector<1x1x1xf32>
    %409 = vector.extract %408[0, 0, 0] : f32 from vector<1x1x1xf32>
    %410 = arith.addf %249, %409 : f32
    %411 = arith.cmpf ogt, %382, %381 : vector<1x256xf32>
    %c1_i32_214 = arith.constant 1 : i32
    %412 = vector.broadcast %c1_i32_214 : i32 to vector<1x256xi32>
    %413 = arith.cmpi eq, %383, %412 : vector<1x256xi32>
    %414 = arith.andi %411, %413 : vector<1x256xi1>
    %415 = arith.andi %414, %396 : vector<1x256xi1>
    %416 = arith.extui %415 : vector<1x256xi1> to vector<1x256xi32>
    %417 = arith.sitofp %416 : vector<1x256xi32> to vector<1x256xf32>
    %418 = vector.shape_cast %417 : vector<1x256xf32> to vector<1x1x256xf32>
    %cst_215 = arith.constant dense<0.000000e+00> : vector<1xf32>
    %419 = vector.multi_reduction <add>, %418, %cst_215 [1, 2] : vector<1x1x256xf32> to vector<1xf32>
    %420 = vector.shape_cast %419 : vector<1xf32> to vector<1x1x1xf32>
    %421 = vector.extract %420[0, 0, 0] : f32 from vector<1x1x1xf32>
    %422 = arith.addf %261, %421 : f32
    %423 = arith.ori %411, %413 : vector<1x256xi1>
    %424 = arith.andi %423, %396 : vector<1x256xi1>
    %425 = arith.extui %424 : vector<1x256xi1> to vector<1x256xi32>
    %426 = arith.sitofp %425 : vector<1x256xi32> to vector<1x256xf32>
    %427 = vector.shape_cast %426 : vector<1x256xf32> to vector<1x1x256xf32>
    %cst_216 = arith.constant dense<0.000000e+00> : vector<1xf32>
    %428 = vector.multi_reduction <add>, %427, %cst_216 [1, 2] : vector<1x1x256xf32> to vector<1xf32>
    %429 = vector.shape_cast %428 : vector<1xf32> to vector<1x1x1xf32>
    %430 = vector.extract %429[0, 0, 0] : f32 from vector<1x1x1xf32>
    %431 = arith.addf %270, %430 : f32
    %cst_217 = arith.constant 1.000000e+00 : f32
    %432 = arith.maximumf %410, %cst_217 : f32
    %433 = arith.divf %405, %432 : f32
    %c0_218 = arith.constant 0 : index
    %c0_219 = arith.constant 0 : index
    %434 = memref.load %arg9[%c0_218, %c0_219] : memref<1x1xf32, #tpu.memory_space<smem>>
    memref.store %433, %arg9[%c0_218, %c0_219] : memref<1x1xf32, #tpu.memory_space<smem>>
    %cst_220 = arith.constant 9.99999997E-7 : f32
    %435 = arith.maximumf %431, %cst_220 : f32
    %436 = arith.divf %422, %435 : f32
    %cst_221 = arith.constant 1.000000e+00 : f32
    %437 = arith.subf %cst_221, %436 : f32
    %c0_222 = arith.constant 0 : index
    %c0_223 = arith.constant 0 : index
    %438 = memref.load %arg10[%c0_222, %c0_223] : memref<1x1xf32, #tpu.memory_space<smem>>
    memref.store %437, %arg10[%c0_222, %c0_223] : memref<1x1xf32, #tpu.memory_space<smem>>
    return
  }
}

</mosaic_0001>

<llo_original>
// kernel: squeeze.3
$region0: #{squeeze.3}
  %s0 = inlined_call_operand.vmem [shape: f32[2,1,16,16], index: 0, kind: input, shape index: {}]
  %s1 = inlined_call_operand.vmem [shape: f32[2,256], index: 1, kind: output, shape index: {}]
  $region1: #{squeeze.3} parent=0
    #allocation0 [shape = 'u8[8192]{0}', space=vmem, size = 0x2000, scoped, tag = 'scoped mem for output reshape']
    %v2 = vld [vmem:[%s0] ss:$8 sm:$0xf]
    %vm3 = vcmask 130048
    %4 = vst.msk [vmem:[#allocation0] ss:$8 sm:$0x3] %vm3, %v2
    %s5 = scalar_lea.vmem [#allocation0], 4294967281
    %6 = vst.msk [vmem:[%s5] ss:$8 sm:$0xc] %vm3, %v2
    %s7 = scalar_lea.vmem %s0, 7
    %s8 = smov 3
    %v9 = vld [vmem:[%s7] ss:$16 sm:%s8]
    %s10 = scalar_lea.vmem %s0, 4294967279
    %s11 = smov 12
    %v12 = vld [vmem:[%s10] ss:$16 sm:%s11]
    %vm13 = vcmask 1043458
    %v14 = vsel %vm13, %v12, %v9
    %15 = vrot.lane.b32.xlu0 %v14, 112
    %v16 = vpop.permute.xlu0 %15
    %vm17 = vcmask 1048448
    %18 = vst.msk [vmem:[#allocation0] sm:$0x3] %vm17, %v16
    %s19 = scalar_lea.vmem [#allocation0], 6
    %20 = vst.msk [vmem:[%s19] sm:$0xc] %vm17, %v16
    %s21 = scalar_lea.vmem %s0, 6
    %s22 = smov 3
    %v23 = vld [vmem:[%s21] ss:$16 sm:%s22]
    %s24 = scalar_lea.vmem %s0, 4294967278
    %s25 = smov 12
    %v26 = vld [vmem:[%s24] ss:$16 sm:%s25]
    %vm27 = vcmask 1043458
    %v28 = vsel %vm27, %v26, %v23
    %29 = vrot.lane.b32.xlu0 %v28, 96
    %v30 = vpop.permute.xlu0 %29
    %vm31 = vcmask 917248
    %32 = vst.msk [vmem:[#allocation0] sm:$0x3] %vm31, %v30
    %s33 = scalar_lea.vmem [#allocation0], 6
    %34 = vst.msk [vmem:[%s33] sm:$0xc] %vm31, %v30
    %s35 = scalar_lea.vmem %s0, 5
    %s36 = smov 3
    %v37 = vld [vmem:[%s35] ss:$16 sm:%s36]
    %s38 = scalar_lea.vmem %s0, 4294967277
    %s39 = smov 12
    %v40 = vld [vmem:[%s38] ss:$16 sm:%s39]
    %vm41 = vcmask 1043458
    %v42 = vsel %vm41, %v40, %v37
    %43 = vrot.lane.b32.xlu0 %v42, 80
    %v44 = vpop.permute.xlu0 %43
    %vm45 = vcmask 786048
    %46 = vst.msk [vmem:[#allocation0] sm:$0x3] %vm45, %v44
    %s47 = scalar_lea.vmem [#allocation0], 6
    %48 = vst.msk [vmem:[%s47] sm:$0xc] %vm45, %v44
    %s49 = scalar_lea.vmem %s0, 4
    %s50 = smov 3
    %v51 = vld [vmem:[%s49] ss:$16 sm:%s50]
    %s52 = scalar_lea.vmem %s0, 4294967276
    %s53 = smov 12
    %v54 = vld [vmem:[%s52] ss:$16 sm:%s53]
    %vm55 = vcmask 1043458
    %v56 = vsel %vm55, %v54, %v51
    %57 = vrot.lane.b32.xlu0 %v56, 64
    %v58 = vpop.permute.xlu0 %57
    %vm59 = vcmask 654848
    %60 = vst.msk [vmem:[#allocation0] sm:$0x3] %vm59, %v58
    %s61 = scalar_lea.vmem [#allocation0], 6
    %62 = vst.msk [vmem:[%s61] sm:$0xc] %vm59, %v58
    %s63 = scalar_lea.vmem %s0, 3
    %s64 = smov 3
    %v65 = vld [vmem:[%s63] ss:$16 sm:%s64]
    %s66 = scalar_lea.vmem %s0, 4294967275
    %s67 = smov 12
    %v68 = vld [vmem:[%s66] ss:$16 sm:%s67]
    %vm69 = vcmask 1043458
    %v70 = vsel %vm69, %v68, %v65
    %71 = vrot.lane.b32.xlu0 %v70, 48
    %v72 = vpop.permute.xlu0 %71
    %vm73 = vcmask 523648
    %74 = vst.msk [vmem:[#allocation0] sm:$0x3] %vm73, %v72
    %s75 = scalar_lea.vmem [#allocation0], 6
    %76 = vst.msk [vmem:[%s75] sm:$0xc] %vm73, %v72
    %s77 = scalar_lea.vmem %s0, 2
    %s78 = smov 3
    %v79 = vld [vmem:[%s77] ss:$16 sm:%s78]
    %s80 = scalar_lea.vmem %s0, 4294967274
    %s81 = smov 12
    %v82 = vld [vmem:[%s80] ss:$16 sm:%s81]
    %vm83 = vcmask 1043458
    %v84 = vsel %vm83, %v82, %v79
    %85 = vrot.lane.b32.xlu0 %v84, 32
    %v86 = vpop.permute.xlu0 %85
    %vm87 = vcmask 392448
    %88 = vst.msk [vmem:[#allocation0] sm:$0x3] %vm87, %v86
    %s89 = scalar_lea.vmem [#allocation0], 6
    %90 = vst.msk [vmem:[%s89] sm:$0xc] %vm87, %v86
    %s91 = scalar_lea.vmem %s0, 1
    %s92 = smov 3
    %v93 = vld [vmem:[%s91] ss:$16 sm:%s92]
    %s94 = scalar_lea.vmem %s0, 4294967273
    %s95 = smov 12
    %v96 = vld [vmem:[%s94] ss:$16 sm:%s95]
    %vm97 = vcmask 1043458
    %v98 = vsel %vm97, %v96, %v93
    %99 = vrot.lane.b32.xlu0 %v98, 16
    %v100 = vpop.permute.xlu0 %99
    %vm101 = vcmask 261248
    %102 = vst.msk [vmem:[#allocation0] sm:$0x3] %vm101, %v100
    %s103 = scalar_lea.vmem [#allocation0], 6
    %104 = vst.msk [vmem:[%s103] sm:$0xc] %vm101, %v100
    %s106 = ssub.s32 4, 1
    %v107 = vld [vmem:[#allocation0] sm:%s106]
    %s109 = ssub.s32 4, 1
    %110 = vst [vmem:[%s1] sm:%s109] %v107
    %s111 = scalar_lea.vmem [#allocation0], 8
    %v112 = vld [vmem:[%s111] sm:%s106]
    %s114 = ssub.s32 4, 1
    %s115 = scalar_lea.vmem %s1, 2
    %116 = vst [vmem:[%s115] sm:%s114] %v112

// kernel: segment_model_forward_test.1
$region0: #{segment_model_forward_test.1}
  #allocation0 [shape = 'u32[]', space=smem, size = 0x4, offset = 0x4, fixed_abs, tag = 'smem constant byte address 0x4 - core index']
  #allocation1 [shape = 'u32[72,128]{1,0:T(1,128)}', space=vmem, size = 0x9000, scoped, tag = 'internal scratch']
  #allocation2 [shape = 'f32[8,256]{1,0:T(8,128)}', space=vmem, size = 0x2000, scoped, tag = 'scratch operand']
  %s0 = inlined_call_operand.vmem [shape: f32[3,2], index: 0, kind: input, shape index: {}]
  %s1 = inlined_call_operand.vmem [shape: f32[2,4,256], index: 1, kind: input, shape index: {}]
  %s2 = inlined_call_operand.vmem [shape: f32[2,256], index: 2, kind: input, shape index: {}]
  %s3 = inlined_call_operand.vmem [shape: f32[9,8,8], index: 3, kind: input, shape index: {}]
  %s4 = inlined_call_operand.vmem [shape: f32[8,1], index: 4, kind: input, shape index: {}]
  %s5 = inlined_call_operand.vmem [shape: f32[2,8], index: 5, kind: input, shape index: {}]
  %s6 = inlined_call_operand.vmem [shape: f32[2,1], index: 6, kind: input, shape index: {}]
  %s7 = inlined_call_operand.vmem [shape: f32[2,2,256], index: 7, kind: output, shape index: {0}]
  %s8 = inlined_call_operand.vmem [shape: s32[2,256], index: 8, kind: output, shape index: {1}]
  %s9 = inlined_call_operand.hbm [shape: f32[1,1], index: 9, kind: output, shape index: {2}]
  %s10 = inlined_call_operand.hbm [shape: f32[1,1], index: 10, kind: output, shape index: {3}]
  %11 = xla_tuple %s7, %s8, %s9, %s10
  %s12 = sld [smem:[#allocation0]]
  $region66: #{segment_model_forward_test.1} parent=0
    _
  %s14 = ssub.s32 1, %s12
  %s15 = scalar_select 0, %s14, %s12
  $region1: #{segment_model_forward_test.1} parent=0
    #allocation3 [shape = 'u8[2048]{0}', space=smem, size = 0x800, scoped, tag = 'input window, operand 0, single buffered']
    #allocation4 [shape = 's32[1]{0}', space=sflag, size = 0x4, scoped, tag = 'scoped memory for segment_model_forward_test.1']
    #allocation5 [shape = 's32[1]{0}', space=sflag, size = 0x4, scoped, tag = 'scoped memory for segment_model_forward_test.1']
    #allocation6 [shape = 'u8[512]{0}', space=smem, size = 0x200, scoped, tag = 'output window, operand 2, single buffered']
    #allocation7 [shape = 'u8[512]{0}', space=smem, size = 0x200, scoped, tag = 'output window, operand 3, single buffered']
    #allocation8 [shape = 's32[1]{0}', space=sflag, size = 0x4, scoped, tag = 'scoped memory for segment_model_forward_test.1']
    %16 = vsyncpa [#allocation5], 0
    %17 = vsyncpa [#allocation4], 0
    %18 = vsyncpa [#allocation8], 0
    // Predicated region
    $region2: #{segment_model_forward_test.1} parent=1 // pred_check
      _
    $region3: #{segment_model_forward_test.1} parent=1 // pred_check_branch
      %20 = sbr.rel (0) target = $region5
    $region4: #{segment_model_forward_test.1} parent=1 // pred_region
      %22 = vsyncadd [#allocation5], 0
      %s24 = sshll.u32 %s0, 4
      %s25 = int_to_ptr.vmem [resolvable:$true] %s24
      %27 = dma.vmem_to_smem %s25, 64, [#allocation3], [#allocation5]
    $region5: #{segment_model_forward_test.1} parent=1 // pred_fallthru
      _
    // Predicated region
    $region6: #{segment_model_forward_test.1} parent=1 // pred_check
      _
    $region7: #{segment_model_forward_test.1} parent=1 // pred_check_branch
      %29 = sbr.rel (0) target = $region9
    $region8: #{segment_model_forward_test.1} parent=1 // pred_region
      _
    $region9: #{segment_model_forward_test.1} parent=1 // pred_fallthru
      _
    // Predicated region
    $region10: #{segment_model_forward_test.1} parent=1 // pred_check
      _
    $region11: #{segment_model_forward_test.1} parent=1 // pred_check_branch
      %31 = sbr.rel (0) target = $region13
    $region12: #{segment_model_forward_test.1} parent=1 // pred_region
      _
    $region13: #{segment_model_forward_test.1} parent=1 // pred_fallthru
      _
    // Predicated region
    $region14: #{segment_model_forward_test.1} parent=1 // pred_check
      _
    $region15: #{segment_model_forward_test.1} parent=1 // pred_check_branch
      %33 = sbr.rel (0) target = $region17
    $region16: #{segment_model_forward_test.1} parent=1 // pred_region
      _
    $region17: #{segment_model_forward_test.1} parent=1 // pred_fallthru
      _
    // Predicated region
    $region18: #{segment_model_forward_test.1} parent=1 // pred_check
      _
    $region19: #{segment_model_forward_test.1} parent=1 // pred_check_branch
      %35 = sbr.rel (0) target = $region21
    $region20: #{segment_model_forward_test.1} parent=1 // pred_region
      _
    $region21: #{segment_model_forward_test.1} parent=1 // pred_fallthru
      _
    // Predicated region
    $region22: #{segment_model_forward_test.1} parent=1 // pred_check
      _
    $region23: #{segment_model_forward_test.1} parent=1 // pred_check_branch
      %37 = sbr.rel (0) target = $region25
    $region24: #{segment_model_forward_test.1} parent=1 // pred_region
      _
    $region25: #{segment_model_forward_test.1} parent=1 // pred_fallthru
      _
    // Predicated region
    $region26: #{segment_model_forward_test.1} parent=1 // pred_check
      _
    $region27: #{segment_model_forward_test.1} parent=1 // pred_check_branch
      %39 = sbr.rel (0) target = $region29
    $region28: #{segment_model_forward_test.1} parent=1 // pred_region
      _
    $region29: #{segment_model_forward_test.1} parent=1 // pred_fallthru
      _
    // Predicated region
    $region30: #{segment_model_forward_test.1} parent=1 // pred_check
      _
    $region31: #{segment_model_forward_test.1} parent=1 // pred_check_branch
      %41 = sbr.rel (0) target = $region33
    $region32: #{segment_model_forward_test.1} parent=1 // pred_region
      %43 = dma.done [#allocation5], 64
    $region33: #{segment_model_forward_test.1} parent=1 // pred_fallthru
      _
    %44 = sfence
    %v45 = vlaneseq
    %v46 = vand.u32 %v45, 127
    %v47 = vadd.s32 %v46, 128
    %v48 = vand.u32 %v46, 15
    %v49 = vand.u32 %v47, 15
    %vm50 = vcmp.ge.s32.totalorder %v46, 16
    %vm51 = vcmp.ge.s32.totalorder %v47, 16
    %vm52 = vcmp.gt.s32.totalorder %v48, 0
    %vm53 = vcmp.gt.s32.totalorder %v49, 0
    %vm54 = vmand %vm50, %vm52
    %vm55 = vmand %vm51, %vm53
    %vm56 = vcmp.lt.s32.totalorder %v48, 15
    %vm57 = vcmp.lt.s32.totalorder %v49, 15
    %vm58 = vmand %vm50, %vm56
    %vm59 = vmand %vm51, %vm57
    %vm60 = vcmp.lt.s32.totalorder %v46, 240
    %vm61 = vcmp.lt.s32.totalorder %v47, 240
    %vm62 = vmand %vm60, %vm52
    %vm63 = vmand %vm61, %vm53
    %vm64 = vmand %vm60, %vm56
    %vm65 = vmand %vm61, %vm57
    %v66 = vld [vmem:[%s2] sm:$0xf]
    %68 = vst [vmem:[#allocation1] ss:$4 sm:$0xff] %v66
    %v69 = vld.sshfl [vmem:[#allocation1] sm:$0xff pattern:$0x73625140]
    %v70 = vld.sshfl [vmem:[#allocation1 + $0x8] sm:$0xff pattern:$0x73625140]
    %73 = vrot.lane.b32.xlu0 %v69, 17
    %v74 = vpop.permute.xlu0 %73
    %75 = vrot.lane.b32.xlu0 %v70, 17
    %v76 = vpop.permute.xlu0 %75
    %vm77 = vcmp.lt.s32.totalorder %v46, 17
    %v78 = vsel %vm77, %v74, %v76
    %v79 = vsel %vm77, %v76, %v74
    %v80 = vsel %vm54, 1, 0
    %v81 = vsel %vm55, 1, 0
    %vm82 = vcmp.eq.s32.totalorder %v80, 1
    %vm83 = vcmp.eq.s32.totalorder %v81, 1
    %v84 = vsel %vm82, %v79, -inf
    %v85 = vsel %vm83, %v78, -inf
    %v88 = vrot.slane %v85, 6
    %vm89 = vcmask 1041408
    %v90 = vsel %vm89, %v84, %v88
    %v92 = vmax.f32 %v66, %v90
    %93 = vst [vmem:[#allocation1] ss:$4 sm:$0xff] %v66
    %v94 = vld.sshfl [vmem:[#allocation1] sm:$0xff pattern:$0x73625140]
    %v95 = vld.sshfl [vmem:[#allocation1 + $0x8] sm:$0xff pattern:$0x73625140]
    %98 = vrot.lane.b32.xlu0 %v94, 16
    %v99 = vpop.permute.xlu0 %98
    %100 = vrot.lane.b32.xlu0 %v95, 16
    %v101 = vpop.permute.xlu0 %100
    %vm102 = vcmp.lt.s32.totalorder %v46, 16
    %v103 = vsel %vm102, %v99, %v101
    %v104 = vsel %vm102, %v101, %v99
    %v105 = vsel %vm50, 1, 0
    %v106 = vsel %vm51, 1, 0
    %vm107 = vcmp.eq.s32.totalorder %v105, 1
    %vm108 = vcmp.eq.s32.totalorder %v106, 1
    %v109 = vsel %vm107, %v104, -inf
    %v110 = vsel %vm108, %v103, -inf
    %v113 = vrot.slane %v110, 6
    %v114 = vsel %vm89, %v109, %v113
    %v116 = vmax.f32 %v92, %v114
    %117 = vst [vmem:[#allocation1] ss:$4 sm:$0xff] %v66
    %v118 = vld.sshfl [vmem:[#allocation1] sm:$0xff pattern:$0x73625140]
    %v119 = vld.sshfl [vmem:[#allocation1 + $0x8] sm:$0xff pattern:$0x73625140]
    %122 = vrot.lane.b32.xlu0 %v118, 15
    %v123 = vpop.permute.xlu0 %122
    %124 = vrot.lane.b32.xlu0 %v119, 15
    %v125 = vpop.permute.xlu0 %124
    %vm126 = vcmp.lt.s32.totalorder %v46, 15
    %v127 = vsel %vm126, %v123, %v125
    %v128 = vsel %vm126, %v125, %v123
    %v129 = vsel %vm58, 1, 0
    %v130 = vsel %vm59, 1, 0
    %vm131 = vcmp.eq.s32.totalorder %v129, 1
    %vm132 = vcmp.eq.s32.totalorder %v130, 1
    %v133 = vsel %vm131, %v128, -inf
    %v134 = vsel %vm132, %v127, -inf
    %v137 = vrot.slane %v134, 6
    %v138 = vsel %vm89, %v133, %v137
    %v140 = vmax.f32 %v116, %v138
    %141 = vst [vmem:[#allocation1] ss:$4 sm:$0xff] %v66
    %v142 = vld.sshfl [vmem:[#allocation1] sm:$0xff pattern:$0x73625140]
    %v143 = vld.sshfl [vmem:[#allocation1 + $0x8] sm:$0xff pattern:$0x73625140]
    %146 = vrot.lane.b32.xlu0 %v142, 1
    %v147 = vpop.permute.xlu0 %146
    %148 = vrot.lane.b32.xlu0 %v143, 1
    %v149 = vpop.permute.xlu0 %148
    %vm150 = vcmp.lt.s32.totalorder %v46, 1
    %v151 = vsel %vm150, %v147, %v149
    %v152 = vsel %vm150, %v149, %v147
    %v153 = vsel %vm52, 1, 0
    %v154 = vsel %vm53, 1, 0
    %vm155 = vcmp.eq.s32.totalorder %v153, 1
    %vm156 = vcmp.eq.s32.totalorder %v154, 1
    %v157 = vsel %vm155, %v152, -inf
    %v158 = vsel %vm156, %v151, -inf
    %v161 = vrot.slane %v158, 6
    %v162 = vsel %vm89, %v157, %v161
    %v164 = vmax.f32 %v140, %v162
    %165 = vst [vmem:[#allocation1] ss:$4 sm:$0xff] %v66
    %v166 = vld.sshfl [vmem:[#allocation1] sm:$0xff pattern:$0x73625140]
    %v167 = vld.sshfl [vmem:[#allocation1 + $0x8] sm:$0xff pattern:$0x73625140]
    %170 = vrot.lane.b32.xlu0 %v166, 127
    %v171 = vpop.permute.xlu0 %170
    %172 = vrot.lane.b32.xlu0 %v167, 127
    %v173 = vpop.permute.xlu0 %172
    %vm174 = vcmp.lt.s32.totalorder %v46, 127
    %v175 = vsel %vm174, %v171, %v173
    %v176 = vsel %vm174, %v173, %v171
    %v177 = vsel %vm56, 1, 0
    %v178 = vsel %vm57, 1, 0
    %vm179 = vcmp.eq.s32.totalorder %v177, 1
    %vm180 = vcmp.eq.s32.totalorder %v178, 1
    %v181 = vsel %vm179, %v175, -inf
    %v182 = vsel %vm180, %v176, -inf
    %v185 = vrot.slane %v182, 6
    %v186 = vsel %vm89, %v181, %v185
    %v188 = vmax.f32 %v164, %v186
    %189 = vst [vmem:[#allocation1] ss:$4 sm:$0xff] %v66
    %v190 = vld.sshfl [vmem:[#allocation1] sm:$0xff pattern:$0x73625140]
    %v191 = vld.sshfl [vmem:[#allocation1 + $0x8] sm:$0xff pattern:$0x73625140]
    %194 = vrot.lane.b32.xlu0 %v190, 113
    %v195 = vpop.permute.xlu0 %194
    %196 = vrot.lane.b32.xlu0 %v191, 113
    %v197 = vpop.permute.xlu0 %196
    %vm198 = vcmp.lt.s32.totalorder %v46, 113
    %v199 = vsel %vm198, %v195, %v197
    %v200 = vsel %vm198, %v197, %v195
    %v201 = vsel %vm62, 1, 0
    %v202 = vsel %vm63, 1, 0
    %vm203 = vcmp.eq.s32.totalorder %v201, 1
    %vm204 = vcmp.eq.s32.totalorder %v202, 1
    %v205 = vsel %vm203, %v199, -inf
    %v206 = vsel %vm204, %v200, -inf
    %v209 = vrot.slane %v206, 6
    %v210 = vsel %vm89, %v205, %v209
    %v212 = vmax.f32 %v188, %v210
    %213 = vst [vmem:[#allocation1] ss:$4 sm:$0xff] %v66
    %v214 = vld.sshfl [vmem:[#allocation1] sm:$0xff pattern:$0x73625140]
    %v215 = vld.sshfl [vmem:[#allocation1 + $0x8] sm:$0xff pattern:$0x73625140]
    %218 = vrot.lane.b32.xlu0 %v214, 112
    %v219 = vpop.permute.xlu0 %218
    %220 = vrot.lane.b32.xlu0 %v215, 112
    %v221 = vpop.permute.xlu0 %220
    %vm222 = vcmp.lt.s32.totalorder %v46, 112
    %v223 = vsel %vm222, %v219, %v221
    %v224 = vsel %vm222, %v221, %v219
    %v225 = vsel %vm60, 1, 0
    %v226 = vsel %vm61, 1, 0
    %vm227 = vcmp.eq.s32.totalorder %v225, 1
    %vm228 = vcmp.eq.s32.totalorder %v226, 1
    %v229 = vsel %vm227, %v223, -inf
    %v230 = vsel %vm228, %v224, -inf
    %v233 = vrot.slane %v230, 6
    %v234 = vsel %vm89, %v229, %v233
    %v236 = vmax.f32 %v212, %v234
    %237 = vst [vmem:[#allocation1] ss:$4 sm:$0xff] %v66
    %v238 = vld.sshfl [vmem:[#allocation1] sm:$0xff pattern:$0x73625140]
    %v239 = vld.sshfl [vmem:[#allocation1 + $0x8] sm:$0xff pattern:$0x73625140]
    %242 = vrot.lane.b32.xlu0 %v238, 111
    %v243 = vpop.permute.xlu0 %242
    %244 = vrot.lane.b32.xlu0 %v239, 111
    %v245 = vpop.permute.xlu0 %244
    %vm246 = vcmp.lt.s32.totalorder %v46, 111
    %v247 = vsel %vm246, %v243, %v245
    %v248 = vsel %vm246, %v245, %v243
    %v249 = vsel %vm64, 1, 0
    %v250 = vsel %vm65, 1, 0
    %vm251 = vcmp.eq.s32.totalorder %v249, 1
    %vm252 = vcmp.eq.s32.totalorder %v250, 1
    %v253 = vsel %vm251, %v247, -inf
    %v254 = vsel %vm252, %v248, -inf
    %v257 = vrot.slane %v254, 6
    %v258 = vsel %vm89, %v253, %v257
    %v260 = vmax.f32 %v236, %v258
    %vm261 = vcmp.gt.f32.partialorder %v260, 1e-06
    %v262 = vsel %vm261, 255, 0
    %vm263 = vcmp.gt.f32.partialorder %v66, 1e-06
    %v264 = vsel %vm263, 1, %v262
    %265 = vst [vmem:[%s8] sm:$0xf] %v264
    %266 = vst [vmem:[#allocation2] sm:$0xff] 0.0
    %267 = vst [vmem:[#allocation2 + $0x8] sm:$0xff] 0.0
    %v268 = vld [vmem:[%s1] sm:$0xff]
    %270 = vst [vmem:[#allocation1] ss:$2 sm:$0xff] %v268
    %v271 = vld.sshfl [vmem:[#allocation1] sm:$0xff pattern:$0x75316420]
    %v272 = vld.sshfl [vmem:[#allocation1 + $0x8] sm:$0xff pattern:$0x75316420]
    %275 = vst [vmem:[#allocation2] sm:$0xf] %v271
    %276 = vst [vmem:[#allocation2 + $0x8] sm:$0xf] %v272
    %s277 = sld [smem:[#allocation3]]
    %v278 = vstv %s277
    %v279 = vlaneseq
    %vm280 = vcmp.ge.s32.totalorder %v279, 0
    %vm281 = vcmp.lt.s32.totalorder %v279, 256
    %vm282 = vmand %vm280, %vm281
    %s283 = scalar_lea.vmem [#allocation2], 4
    %284 = vst.msk [vmem:[%s283] ss:$8 sm:$0x3] %vm282, %v278
    %285 = vst.msk [vmem:[%s283] ss:$8 sm:$0x0] %vm282, %v278
    %s286 = sld [smem:[#allocation3 + $0x80]]
    %v287 = vstv %s286
    %s288 = scalar_lea.vmem [#allocation2], 5
    %289 = vst.msk [vmem:[%s288] ss:$8 sm:$0x3] %vm282, %v287
    %290 = vst.msk [vmem:[%s288] ss:$8 sm:$0x0] %vm282, %v287
    %s291 = sld [smem:[#allocation3 + $0x100]]
    %v292 = vstv %s291
    %s293 = scalar_lea.vmem [#allocation2], 6
    %294 = vst.msk [vmem:[%s293] ss:$8 sm:$0x3] %vm282, %v292
    %295 = vst.msk [vmem:[%s293] ss:$8 sm:$0x0] %vm282, %v292
    %v296 = vld [vmem:[#allocation2] sm:$0xff]
    %v297 = vld [vmem:[#allocation2 + $0x8] sm:$0xff]
    %298 = vrot.lane.b32.xlu0 %v296, 17
    %v299 = vpop.permute.xlu0 %298
    %300 = vrot.lane.b32.xlu0 %v297, 17
    %v301 = vpop.permute.xlu0 %300
    %v302 = vsel %vm77, %v299, %v301
    %v303 = vsel %vm77, %v301, %v299
    %v304 = vsel %vm82, %v303, 0.0
    %v305 = vsel %vm83, %v302, 0.0
    %v306 = vld [vmem:[%s3] sm:$0xff]
    %307 = vrot.lane.b32.xlu0 %v296, 16
    %v308 = vpop.permute.xlu0 %307
    %309 = vrot.lane.b32.xlu0 %v297, 16
    %v310 = vpop.permute.xlu0 %309
    %v311 = vsel %vm102, %v308, %v310
    %v312 = vsel %vm102, %v310, %v308
    %v313 = vsel %vm107, %v312, 0.0
    %v314 = vsel %vm108, %v311, 0.0
    %s315 = scalar_lea.vmem %s3, 8
    %v316 = vld [vmem:[%s315] sm:$0xff]
    %vm317 = vcmask 64512
    %v319 = vsel %vm317, %v316, 0
    %321 = vmatpush.msra.mxu0 0.0
    %322 = vmatpush.msra.mxu0 0.0
    %323 = vmatpush.msra.mxu0 0.0
    %324 = vmatpush.msra.mxu0 0.0
    %325 = vmatpush.msra.mxu0 0.0
    %326 = vmatpush.msra.mxu0 0.0
    %327 = vmatpush.msra.mxu0 0.0
    %328 = vmatpush.msra.mxu0 0.0
    %329 = vmatpush.msra.mxu0 0.0
    %330 = vmatpush.msra.mxu0 0.0
    %331 = vmatpush.msra.mxu0 0.0
    %332 = vmatpush.msra.mxu0 0.0
    %333 = vmatpush.msra.mxu0 0.0
    %334 = vmatpush.msra.mxu0 0.0
    %335 = vmatpush.msra.mxu0 0.0
    %336 = vmatpush.msra.mxu0 %v313
    %337 = vmatmul.f32.gmra.mxu0 %v319
    %v338 = vpop.f32.mrf.mxu0
    %v339 = vadd.f32 0.0, %v338
    %340 = vdwg.mxu0
    %341 = vmatpush.msra.mxu0 0.0
    %342 = vmatpush.msra.mxu0 0.0
    %343 = vmatpush.msra.mxu0 0.0
    %344 = vmatpush.msra.mxu0 0.0
    %345 = vmatpush.msra.mxu0 0.0
    %346 = vmatpush.msra.mxu0 0.0
    %347 = vmatpush.msra.mxu0 0.0
    %348 = vmatpush.msra.mxu0 0.0
    %349 = vmatpush.msra.mxu0 0.0
    %350 = vmatpush.msra.mxu0 0.0
    %351 = vmatpush.msra.mxu0 0.0
    %352 = vmatpush.msra.mxu0 0.0
    %353 = vmatpush.msra.mxu0 0.0
    %354 = vmatpush.msra.mxu0 0.0
    %355 = vmatpush.msra.mxu0 0.0
    %356 = vmatpush.msra.mxu0 %v314
    %357 = vmatmul.f32.gmra.mxu0 %v319
    %v358 = vpop.f32.mrf.mxu0
    %v359 = vadd.f32 0.0, %v358
    %360 = vdwg.mxu0
    %v362 = vsel %vm317, %v306, 0
    %364 = vmatpush.msra.mxu0 0.0
    %365 = vmatpush.msra.mxu0 0.0
    %366 = vmatpush.msra.mxu0 0.0
    %367 = vmatpush.msra.mxu0 0.0
    %368 = vmatpush.msra.mxu0 0.0
    %369 = vmatpush.msra.mxu0 0.0
    %370 = vmatpush.msra.mxu0 0.0
    %371 = vmatpush.msra.mxu0 0.0
    %372 = vmatpush.msra.mxu0 0.0
    %373 = vmatpush.msra.mxu0 0.0
    %374 = vmatpush.msra.mxu0 0.0
    %375 = vmatpush.msra.mxu0 0.0
    %376 = vmatpush.msra.mxu0 0.0
    %377 = vmatpush.msra.mxu0 0.0
    %378 = vmatpush.msra.mxu0 0.0
    %379 = vmatpush.msra.mxu0 %v304
    %380 = vmatmul.f32.gmra.mxu0 %v362
    %v381 = vpop.f32.mrf.mxu0
    %v382 = vadd.f32 %v339, %v381
    %383 = vdwg.mxu0
    %384 = vmatpush.msra.mxu0 0.0
    %385 = vmatpush.msra.mxu0 0.0
    %386 = vmatpush.msra.mxu0 0.0
    %387 = vmatpush.msra.mxu0 0.0
    %388 = vmatpush.msra.mxu0 0.0
    %389 = vmatpush.msra.mxu0 0.0
    %390 = vmatpush.msra.mxu0 0.0
    %391 = vmatpush.msra.mxu0 0.0
    %392 = vmatpush.msra.mxu0 0.0
    %393 = vmatpush.msra.mxu0 0.0
    %394 = vmatpush.msra.mxu0 0.0
    %395 = vmatpush.msra.mxu0 0.0
    %396 = vmatpush.msra.mxu0 0.0
    %397 = vmatpush.msra.mxu0 0.0
    %398 = vmatpush.msra.mxu0 0.0
    %399 = vmatpush.msra.mxu0 %v305
    %400 = vmatmul.f32.gmra.mxu0 %v362
    %v401 = vpop.f32.mrf.mxu0
    %v402 = vadd.f32 %v359, %v401
    %403 = vdwg.mxu0
    %404 = vrot.lane.b32.xlu0 %v296, 15
    %v405 = vpop.permute.xlu0 %404
    %406 = vrot.lane.b32.xlu0 %v297, 15
    %v407 = vpop.permute.xlu0 %406
    %v408 = vsel %vm126, %v405, %v407
    %v409 = vsel %vm126, %v407, %v405
    %v410 = vsel %vm131, %v409, 0.0
    %v411 = vsel %vm132, %v408, 0.0
    %s412 = scalar_lea.vmem %s3, 16
    %v413 = vld [vmem:[%s412] sm:$0xff]
    %v415 = vsel %vm317, %v413, 0
    %417 = vmatpush.msra.mxu0 0.0
    %418 = vmatpush.msra.mxu0 0.0
    %419 = vmatpush.msra.mxu0 0.0
    %420 = vmatpush.msra.mxu0 0.0
    %421 = vmatpush.msra.mxu0 0.0
    %422 = vmatpush.msra.mxu0 0.0
    %423 = vmatpush.msra.mxu0 0.0
    %424 = vmatpush.msra.mxu0 0.0
    %425 = vmatpush.msra.mxu0 0.0
    %426 = vmatpush.msra.mxu0 0.0
    %427 = vmatpush.msra.mxu0 0.0
    %428 = vmatpush.msra.mxu0 0.0
    %429 = vmatpush.msra.mxu0 0.0
    %430 = vmatpush.msra.mxu0 0.0
    %431 = vmatpush.msra.mxu0 0.0
    %432 = vmatpush.msra.mxu0 %v410
    %433 = vmatmul.f32.gmra.mxu0 %v415
    %v434 = vpop.f32.mrf.mxu0
    %v435 = vadd.f32 0.0, %v434
    %436 = vdwg.mxu0
    %437 = vmatpush.msra.mxu0 0.0
    %438 = vmatpush.msra.mxu0 0.0
    %439 = vmatpush.msra.mxu0 0.0
    %440 = vmatpush.msra.mxu0 0.0
    %441 = vmatpush.msra.mxu0 0.0
    %442 = vmatpush.msra.mxu0 0.0
    %443 = vmatpush.msra.mxu0 0.0
    %444 = vmatpush.msra.mxu0 0.0
    %445 = vmatpush.msra.mxu0 0.0
    %446 = vmatpush.msra.mxu0 0.0
    %447 = vmatpush.msra.mxu0 0.0
    %448 = vmatpush.msra.mxu0 0.0
    %449 = vmatpush.msra.mxu0 0.0
    %450 = vmatpush.msra.mxu0 0.0
    %451 = vmatpush.msra.mxu0 0.0
    %452 = vmatpush.msra.mxu0 %v411
    %453 = vmatmul.f32.gmra.mxu0 %v415
    %v454 = vpop.f32.mrf.mxu0
    %v455 = vadd.f32 0.0, %v454
    %456 = vdwg.mxu0
    %v457 = vadd.f32 %v382, %v435
    %v458 = vadd.f32 %v402, %v455
    %459 = vrot.lane.b32.xlu0 %v296, 1
    %v460 = vpop.permute.xlu0 %459
    %461 = vrot.lane.b32.xlu0 %v297, 1
    %v462 = vpop.permute.xlu0 %461
    %v463 = vsel %vm150, %v460, %v462
    %v464 = vsel %vm150, %v462, %v460
    %v465 = vsel %vm155, %v464, 0.0
    %v466 = vsel %vm156, %v463, 0.0
    %s467 = scalar_lea.vmem %s3, 24
    %v468 = vld [vmem:[%s467] sm:$0xff]
    %v470 = vsel %vm317, %v468, 0
    %472 = vmatpush.msra.mxu0 0.0
    %473 = vmatpush.msra.mxu0 0.0
    %474 = vmatpush.msra.mxu0 0.0
    %475 = vmatpush.msra.mxu0 0.0
    %476 = vmatpush.msra.mxu0 0.0
    %477 = vmatpush.msra.mxu0 0.0
    %478 = vmatpush.msra.mxu0 0.0
    %479 = vmatpush.msra.mxu0 0.0
    %480 = vmatpush.msra.mxu0 0.0
    %481 = vmatpush.msra.mxu0 0.0
    %482 = vmatpush.msra.mxu0 0.0
    %483 = vmatpush.msra.mxu0 0.0
    %484 = vmatpush.msra.mxu0 0.0
    %485 = vmatpush.msra.mxu0 0.0
    %486 = vmatpush.msra.mxu0 0.0
    %487 = vmatpush.msra.mxu0 %v465
    %488 = vmatmul.f32.gmra.mxu0 %v470
    %v489 = vpop.f32.mrf.mxu0
    %v490 = vadd.f32 0.0, %v489
    %491 = vdwg.mxu0
    %492 = vmatpush.msra.mxu0 0.0
    %493 = vmatpush.msra.mxu0 0.0
    %494 = vmatpush.msra.mxu0 0.0
    %495 = vmatpush.msra.mxu0 0.0
    %496 = vmatpush.msra.mxu0 0.0
    %497 = vmatpush.msra.mxu0 0.0
    %498 = vmatpush.msra.mxu0 0.0
    %499 = vmatpush.msra.mxu0 0.0
    %500 = vmatpush.msra.mxu0 0.0
    %501 = vmatpush.msra.mxu0 0.0
    %502 = vmatpush.msra.mxu0 0.0
    %503 = vmatpush.msra.mxu0 0.0
    %504 = vmatpush.msra.mxu0 0.0
    %505 = vmatpush.msra.mxu0 0.0
    %506 = vmatpush.msra.mxu0 0.0
    %507 = vmatpush.msra.mxu0 %v466
    %508 = vmatmul.f32.gmra.mxu0 %v470
    %v509 = vpop.f32.mrf.mxu0
    %v510 = vadd.f32 0.0, %v509
    %511 = vdwg.mxu0
    %v512 = vadd.f32 %v457, %v490
    %v513 = vadd.f32 %v458, %v510
    %s514 = scalar_lea.vmem %s3, 32
    %v515 = vld [vmem:[%s514] sm:$0xff]
    %v517 = vsel %vm317, %v515, 0
    %519 = vmatpush.msra.mxu0 0.0
    %520 = vmatpush.msra.mxu0 0.0
    %521 = vmatpush.msra.mxu0 0.0
    %522 = vmatpush.msra.mxu0 0.0
    %523 = vmatpush.msra.mxu0 0.0
    %524 = vmatpush.msra.mxu0 0.0
    %525 = vmatpush.msra.mxu0 0.0
    %526 = vmatpush.msra.mxu0 0.0
    %527 = vmatpush.msra.mxu0 0.0
    %528 = vmatpush.msra.mxu0 0.0
    %529 = vmatpush.msra.mxu0 0.0
    %530 = vmatpush.msra.mxu0 0.0
    %531 = vmatpush.msra.mxu0 0.0
    %532 = vmatpush.msra.mxu0 0.0
    %533 = vmatpush.msra.mxu0 0.0
    %534 = vmatpush.msra.mxu0 %v296
    %535 = vmatmul.f32.gmra.mxu0 %v517
    %v536 = vpop.f32.mrf.mxu0
    %v537 = vadd.f32 0.0, %v536
    %538 = vdwg.mxu0
    %539 = vmatpush.msra.mxu0 0.0
    %540 = vmatpush.msra.mxu0 0.0
    %541 = vmatpush.msra.mxu0 0.0
    %542 = vmatpush.msra.mxu0 0.0
    %543 = vmatpush.msra.mxu0 0.0
    %544 = vmatpush.msra.mxu0 0.0
    %545 = vmatpush.msra.mxu0 0.0
    %546 = vmatpush.msra.mxu0 0.0
    %547 = vmatpush.msra.mxu0 0.0
    %548 = vmatpush.msra.mxu0 0.0
    %549 = vmatpush.msra.mxu0 0.0
    %550 = vmatpush.msra.mxu0 0.0
    %551 = vmatpush.msra.mxu0 0.0
    %552 = vmatpush.msra.mxu0 0.0
    %553 = vmatpush.msra.mxu0 0.0
    %554 = vmatpush.msra.mxu0 %v297
    %555 = vmatmul.f32.gmra.mxu0 %v517
    %v556 = vpop.f32.mrf.mxu0
    %v557 = vadd.f32 0.0, %v556
    %558 = vdwg.mxu0
    %v559 = vadd.f32 %v512, %v537
    %v560 = vadd.f32 %v513, %v557
    %561 = vrot.lane.b32.xlu0 %v296, 127
    %v562 = vpop.permute.xlu0 %561
    %563 = vrot.lane.b32.xlu0 %v297, 127
    %v564 = vpop.permute.xlu0 %563
    %v565 = vsel %vm174, %v562, %v564
    %v566 = vsel %vm174, %v564, %v562
    %v567 = vsel %vm179, %v565, 0.0
    %v568 = vsel %vm180, %v566, 0.0
    %s569 = scalar_lea.vmem %s3, 40
    %v570 = vld [vmem:[%s569] sm:$0xff]
    %v572 = vsel %vm317, %v570, 0
    %574 = vmatpush.msra.mxu0 0.0
    %575 = vmatpush.msra.mxu0 0.0
    %576 = vmatpush.msra.mxu0 0.0
    %577 = vmatpush.msra.mxu0 0.0
    %578 = vmatpush.msra.mxu0 0.0
    %579 = vmatpush.msra.mxu0 0.0
    %580 = vmatpush.msra.mxu0 0.0
    %581 = vmatpush.msra.mxu0 0.0
    %582 = vmatpush.msra.mxu0 0.0
    %583 = vmatpush.msra.mxu0 0.0
    %584 = vmatpush.msra.mxu0 0.0
    %585 = vmatpush.msra.mxu0 0.0
    %586 = vmatpush.msra.mxu0 0.0
    %587 = vmatpush.msra.mxu0 0.0
    %588 = vmatpush.msra.mxu0 0.0
    %589 = vmatpush.msra.mxu0 %v567
    %590 = vmatmul.f32.gmra.mxu0 %v572
    %v591 = vpop.f32.mrf.mxu0
    %v592 = vadd.f32 0.0, %v591
    %593 = vdwg.mxu0
    %594 = vmatpush.msra.mxu0 0.0
    %595 = vmatpush.msra.mxu0 0.0
    %596 = vmatpush.msra.mxu0 0.0
    %597 = vmatpush.msra.mxu0 0.0
    %598 = vmatpush.msra.mxu0 0.0
    %599 = vmatpush.msra.mxu0 0.0
    %600 = vmatpush.msra.mxu0 0.0
    %601 = vmatpush.msra.mxu0 0.0
    %602 = vmatpush.msra.mxu0 0.0
    %603 = vmatpush.msra.mxu0 0.0
    %604 = vmatpush.msra.mxu0 0.0
    %605 = vmatpush.msra.mxu0 0.0
    %606 = vmatpush.msra.mxu0 0.0
    %607 = vmatpush.msra.mxu0 0.0
    %608 = vmatpush.msra.mxu0 0.0
    %609 = vmatpush.msra.mxu0 %v568
    %610 = vmatmul.f32.gmra.mxu0 %v572
    %v611 = vpop.f32.mrf.mxu0
    %v612 = vadd.f32 0.0, %v611
    %613 = vdwg.mxu0
    %v614 = vadd.f32 %v559, %v592
    %v615 = vadd.f32 %v560, %v612
    %616 = vrot.lane.b32.xlu0 %v296, 113
    %v617 = vpop.permute.xlu0 %616
    %618 = vrot.lane.b32.xlu0 %v297, 113
    %v619 = vpop.permute.xlu0 %618
    %v620 = vsel %vm198, %v617, %v619
    %v621 = vsel %vm198, %v619, %v617
    %v622 = vsel %vm203, %v620, 0.0
    %v623 = vsel %vm204, %v621, 0.0
    %s624 = scalar_lea.vmem %s3, 48
    %v625 = vld [vmem:[%s624] sm:$0xff]
    %v627 = vsel %vm317, %v625, 0
    %629 = vmatpush.msra.mxu0 0.0
    %630 = vmatpush.msra.mxu0 0.0
    %631 = vmatpush.msra.mxu0 0.0
    %632 = vmatpush.msra.mxu0 0.0
    %633 = vmatpush.msra.mxu0 0.0
    %634 = vmatpush.msra.mxu0 0.0
    %635 = vmatpush.msra.mxu0 0.0
    %636 = vmatpush.msra.mxu0 0.0
    %637 = vmatpush.msra.mxu0 0.0
    %638 = vmatpush.msra.mxu0 0.0
    %639 = vmatpush.msra.mxu0 0.0
    %640 = vmatpush.msra.mxu0 0.0
    %641 = vmatpush.msra.mxu0 0.0
    %642 = vmatpush.msra.mxu0 0.0
    %643 = vmatpush.msra.mxu0 0.0
    %644 = vmatpush.msra.mxu0 %v622
    %645 = vmatmul.f32.gmra.mxu0 %v627
    %v646 = vpop.f32.mrf.mxu0
    %v647 = vadd.f32 0.0, %v646
    %648 = vdwg.mxu0
    %649 = vmatpush.msra.mxu0 0.0
    %650 = vmatpush.msra.mxu0 0.0
    %651 = vmatpush.msra.mxu0 0.0
    %652 = vmatpush.msra.mxu0 0.0
    %653 = vmatpush.msra.mxu0 0.0
    %654 = vmatpush.msra.mxu0 0.0
    %655 = vmatpush.msra.mxu0 0.0
    %656 = vmatpush.msra.mxu0 0.0
    %657 = vmatpush.msra.mxu0 0.0
    %658 = vmatpush.msra.mxu0 0.0
    %659 = vmatpush.msra.mxu0 0.0
    %660 = vmatpush.msra.mxu0 0.0
    %661 = vmatpush.msra.mxu0 0.0
    %662 = vmatpush.msra.mxu0 0.0
    %663 = vmatpush.msra.mxu0 0.0
    %664 = vmatpush.msra.mxu0 %v623
    %665 = vmatmul.f32.gmra.mxu0 %v627
    %v666 = vpop.f32.mrf.mxu0
    %v667 = vadd.f32 0.0, %v666
    %668 = vdwg.mxu0
    %v669 = vadd.f32 %v614, %v647
    %v670 = vadd.f32 %v615, %v667
    %671 = vrot.lane.b32.xlu0 %v296, 112
    %v672 = vpop.permute.xlu0 %671
    %673 = vrot.lane.b32.xlu0 %v297, 112
    %v674 = vpop.permute.xlu0 %673
    %v675 = vsel %vm222, %v672, %v674
    %v676 = vsel %vm222, %v674, %v672
    %v677 = vsel %vm227, %v675, 0.0
    %v678 = vsel %vm228, %v676, 0.0
    %s679 = scalar_lea.vmem %s3, 56
    %v680 = vld [vmem:[%s679] sm:$0xff]
    %v682 = vsel %vm317, %v680, 0
    %684 = vmatpush.msra.mxu0 0.0
    %685 = vmatpush.msra.mxu0 0.0
    %686 = vmatpush.msra.mxu0 0.0
    %687 = vmatpush.msra.mxu0 0.0
    %688 = vmatpush.msra.mxu0 0.0
    %689 = vmatpush.msra.mxu0 0.0
    %690 = vmatpush.msra.mxu0 0.0
    %691 = vmatpush.msra.mxu0 0.0
    %692 = vmatpush.msra.mxu0 0.0
    %693 = vmatpush.msra.mxu0 0.0
    %694 = vmatpush.msra.mxu0 0.0
    %695 = vmatpush.msra.mxu0 0.0
    %696 = vmatpush.msra.mxu0 0.0
    %697 = vmatpush.msra.mxu0 0.0
    %698 = vmatpush.msra.mxu0 0.0
    %699 = vmatpush.msra.mxu0 %v677
    %700 = vmatmul.f32.gmra.mxu0 %v682
    %v701 = vpop.f32.mrf.mxu0
    %v702 = vadd.f32 0.0, %v701
    %703 = vdwg.mxu0
    %704 = vmatpush.msra.mxu0 0.0
    %705 = vmatpush.msra.mxu0 0.0
    %706 = vmatpush.msra.mxu0 0.0
    %707 = vmatpush.msra.mxu0 0.0
    %708 = vmatpush.msra.mxu0 0.0
    %709 = vmatpush.msra.mxu0 0.0
    %710 = vmatpush.msra.mxu0 0.0
    %711 = vmatpush.msra.mxu0 0.0
    %712 = vmatpush.msra.mxu0 0.0
    %713 = vmatpush.msra.mxu0 0.0
    %714 = vmatpush.msra.mxu0 0.0
    %715 = vmatpush.msra.mxu0 0.0
    %716 = vmatpush.msra.mxu0 0.0
    %717 = vmatpush.msra.mxu0 0.0
    %718 = vmatpush.msra.mxu0 0.0
    %719 = vmatpush.msra.mxu0 %v678
    %720 = vmatmul.f32.gmra.mxu0 %v682
    %v721 = vpop.f32.mrf.mxu0
    %v722 = vadd.f32 0.0, %v721
    %723 = vdwg.mxu0
    %v724 = vadd.f32 %v669, %v702
    %v725 = vadd.f32 %v670, %v722
    %726 = vrot.lane.b32.xlu0 %v296, 111
    %v727 = vpop.permute.xlu0 %726
    %728 = vrot.lane.b32.xlu0 %v297, 111
    %v729 = vpop.permute.xlu0 %728
    %v730 = vsel %vm246, %v727, %v729
    %v731 = vsel %vm246, %v729, %v727
    %v732 = vsel %vm251, %v730, 0.0
    %v733 = vsel %vm252, %v731, 0.0
    %s734 = scalar_lea.vmem %s3, 64
    %v735 = vld [vmem:[%s734] sm:$0xff]
    %v737 = vsel %vm317, %v735, 0
    %739 = vmatpush.msra.mxu0 0.0
    %740 = vmatpush.msra.mxu0 0.0
    %741 = vmatpush.msra.mxu0 0.0
    %742 = vmatpush.msra.mxu0 0.0
    %743 = vmatpush.msra.mxu0 0.0
    %744 = vmatpush.msra.mxu0 0.0
    %745 = vmatpush.msra.mxu0 0.0
    %746 = vmatpush.msra.mxu0 0.0
    %747 = vmatpush.msra.mxu0 0.0
    %748 = vmatpush.msra.mxu0 0.0
    %749 = vmatpush.msra.mxu0 0.0
    %750 = vmatpush.msra.mxu0 0.0
    %751 = vmatpush.msra.mxu0 0.0
    %752 = vmatpush.msra.mxu0 0.0
    %753 = vmatpush.msra.mxu0 0.0
    %754 = vmatpush.msra.mxu0 %v732
    %755 = vmatmul.f32.gmra.mxu0 %v737
    %v756 = vpop.f32.mrf.mxu0
    %v757 = vadd.f32 0.0, %v756
    %758 = vdwg.mxu0
    %759 = vmatpush.msra.mxu0 0.0
    %760 = vmatpush.msra.mxu0 0.0
    %761 = vmatpush.msra.mxu0 0.0
    %762 = vmatpush.msra.mxu0 0.0
    %763 = vmatpush.msra.mxu0 0.0
    %764 = vmatpush.msra.mxu0 0.0
    %765 = vmatpush.msra.mxu0 0.0
    %766 = vmatpush.msra.mxu0 0.0
    %767 = vmatpush.msra.mxu0 0.0
    %768 = vmatpush.msra.mxu0 0.0
    %769 = vmatpush.msra.mxu0 0.0
    %770 = vmatpush.msra.mxu0 0.0
    %771 = vmatpush.msra.mxu0 0.0
    %772 = vmatpush.msra.mxu0 0.0
    %773 = vmatpush.msra.mxu0 0.0
    %774 = vmatpush.msra.mxu0 %v733
    %775 = vmatmul.f32.gmra.mxu0 %v737
    %v776 = vpop.f32.mrf.mxu0
    %v777 = vadd.f32 0.0, %v776
    %778 = vdwg.mxu0
    %v779 = vadd.f32 %v724, %v757
    %v780 = vadd.f32 %v725, %v777
    %v781 = vld [vmem:[%s4] sm:$0xff]
    %783 = vset.pattern.permute.xlu0 0
    %784 = vperm.xlu0 %783, %v781
    %v785 = vpop.permute.xlu0 %784
    %v787 = vadd.f32 %v779, %v785
    %v788 = vadd.f32 %v780, %v785
    %v789 = vmax.f32 %v787, 0.0
    %v790 = vmax.f32 %v788, 0.0
    %v791 = vld [vmem:[%s5] sm:$0x3]
    %v792 = vld [vmem:[%s6] sm:$0x3]
    %794 = vset.pattern.permute.xlu0 0
    %795 = vperm.xlu0 %794, %v792
    %v796 = vpop.permute.xlu0 %795
    %v799 = vsel %vm317, %v791, 0
    %801 = vmatpush.msra.mxu0 0.0
    %802 = vmatpush.msra.mxu0 0.0
    %803 = vmatpush.msra.mxu0 0.0
    %804 = vmatpush.msra.mxu0 0.0
    %805 = vmatpush.msra.mxu0 0.0
    %806 = vmatpush.msra.mxu0 0.0
    %807 = vmatpush.msra.mxu0 0.0
    %808 = vmatpush.msra.mxu0 0.0
    %809 = vmatpush.msra.mxu0 0.0
    %810 = vmatpush.msra.mxu0 0.0
    %811 = vmatpush.msra.mxu0 0.0
    %812 = vmatpush.msra.mxu0 0.0
    %813 = vmatpush.msra.mxu0 0.0
    %814 = vmatpush.msra.mxu0 0.0
    %815 = vmatpush.msra.mxu0 0.0
    %816 = vmatpush.msra.mxu0 %v789
    %817 = vmatmul.f32.gmra.mxu0 %v799
    %v818 = vpop.f32.mrf.mxu0
    %v819 = vadd.f32 %v796, %v818
    %820 = vdwg.mxu0
    %821 = vmatpush.msra.mxu0 0.0
    %822 = vmatpush.msra.mxu0 0.0
    %823 = vmatpush.msra.mxu0 0.0
    %824 = vmatpush.msra.mxu0 0.0
    %825 = vmatpush.msra.mxu0 0.0
    %826 = vmatpush.msra.mxu0 0.0
    %827 = vmatpush.msra.mxu0 0.0
    %828 = vmatpush.msra.mxu0 0.0
    %829 = vmatpush.msra.mxu0 0.0
    %830 = vmatpush.msra.mxu0 0.0
    %831 = vmatpush.msra.mxu0 0.0
    %832 = vmatpush.msra.mxu0 0.0
    %833 = vmatpush.msra.mxu0 0.0
    %834 = vmatpush.msra.mxu0 0.0
    %835 = vmatpush.msra.mxu0 0.0
    %836 = vmatpush.msra.mxu0 %v790
    %837 = vmatmul.f32.gmra.mxu0 %v799
    %v838 = vpop.f32.mrf.mxu0
    %v839 = vadd.f32 %v796, %v838
    %840 = vdwg.mxu0
    %v843 = vrot.slane %v839, 6
    %v844 = vsel %vm89, %v819, %v843
    %846 = vst [vmem:[%s7] sm:$0xf] %v844
    %v847 = vrot.slane %v819, 1
    %v848 = vrot.slane %v839, 1
    %v851 = vmax.f32 %v819, %v847
    %v852 = vmax.f32 %v839, %v848
    %v853 = vsub.f32 %v819, %v851
    %v854 = vsub.f32 %v839, %v852
    %v855 = vmul.f32 %v853, 1.442695
    %v856 = vpow.pop %v855
    %v857 = vmul.f32 %v854, 1.442695
    %v858 = vpow.pop %v857
    %v861 = vrot.slane %v851, 7
    %v862 = vrot.slane %v852, 7
    %v865 = vsub.f32 %v819, %v861
    %v866 = vsub.f32 %v839, %v862
    %v867 = vmul.f32 %v865, 1.442695
    %v868 = vpow.pop %v867
    %v869 = vmul.f32 %v866, 1.442695
    %v870 = vpow.pop %v869
    %v873 = vrot.slane %v868, 1
    %v874 = vrot.slane %v870, 1
    %v877 = vadd.f32 %v856, %v873
    %v878 = vadd.f32 %v858, %v874
    %v879 = vlog2.pop %v877
    %v880 = vmul.f32 %v879, 0.6931472
    %v881 = vlog2.pop %v878
    %v882 = vmul.f32 %v881, 0.6931472
    %v883 = vadd.f32 %v851, %v880
    %v884 = vadd.f32 %v852, %v882
    %vm885 = vcmp.eq.s32.totalorder %v264, 1
    %v886 = vrot.slane %v844, 7
    %v887 = vrot.slane %v886, 2
    %v889 = vsel %vm885, %v887, %v844
    %vm890 = vcmp.ne.s32.totalorder %v264, 255
    %v891 = vsel %vm890, 1, 0
    %v892 = vcvt.s32.f32 %v891
    %v894 = vperm.slane %v889, 0
    %v895 = vperm.slane %v889, 2
    %v898 = vsub.f32 %v883, %v894
    %v899 = vsub.f32 %v884, %v895
    %v901 = vperm.slane %v892, 0
    %v902 = vperm.slane %v892, 2
    %v905 = vmul.f32 %v898, %v901
    %v906 = vmul.f32 %v899, %v902
    %vm907 = vcmask 1040384
    %v908 = vsel %vm907, %v905, 0.0
    %v909 = vsel %vm907, %v906, 0.0
    %v910 = vadd.f32 %v908, %v909
    %911 = vadd.xlane.f32.xlu0 %v910
    %v912 = vpop.xlane.xlu0 %911
    %v913 = vrot.slane %v912, 4
    %v914 = vadd.f32 %v912, %v913
    %v915 = vrot.slane %v914, 2
    %v916 = vadd.f32 %v914, %v915
    %v917 = vrot.slane %v916, 1
    %v918 = vadd.f32 %v916, %v917
    %s919 = vtos %v918
    %s920 = sadd.f32 %s919, 0.0
    %v921 = vsel %vm907, %v901, 0.0
    %v922 = vsel %vm907, %v902, 0.0
    %v923 = vadd.f32 %v921, %v922
    %924 = vadd.xlane.f32.xlu0 %v923
    %v925 = vpop.xlane.xlu0 %924
    %v926 = vrot.slane %v925, 4
    %v927 = vadd.f32 %v925, %v926
    %v928 = vrot.slane %v927, 2
    %v929 = vadd.f32 %v927, %v928
    %v930 = vrot.slane %v929, 1
    %v931 = vadd.f32 %v929, %v930
    %s932 = vtos %v931
    %s933 = sadd.f32 %s932, 0.0
    %v934 = vrot.slane %v819, 7
    %v935 = vrot.slane %v839, 7
    %vm938 = vcmp.gt.f32.partialorder %v819, %v934
    %vm939 = vcmp.gt.f32.partialorder %v839, %v935
    %v940 = vsel %vm885, 1, 0
    %v941 = vperm.slane %v940, 0
    %v942 = vperm.slane %v940, 2
    %vm943 = vcmp.ne.s32.totalorder %v941, 0
    %vm944 = vcmp.ne.s32.totalorder %v942, 0
    %vm945 = vmand %vm938, %vm943
    %vm946 = vmand %vm939, %vm944
    %v947 = vperm.slane %v891, 0
    %v948 = vperm.slane %v891, 2
    %vm949 = vcmp.ne.s32.totalorder %v947, 0
    %vm950 = vcmp.ne.s32.totalorder %v948, 0
    %vm951 = vmand %vm945, %vm949
    %vm952 = vmand %vm946, %vm950
    %v953 = vsel %vm951, 1, 0
    %v954 = vsel %vm952, 1, 0
    %v955 = vcvt.s32.f32 %v953
    %v956 = vcvt.s32.f32 %v954
    %v959 = vrot.slane %v955, 1
    %v960 = vrot.slane %v956, 1
    %v963 = vsel %vm907, %v959, 0.0
    %v964 = vsel %vm907, %v960, 0.0
    %v965 = vadd.f32 %v963, %v964
    %966 = vadd.xlane.f32.xlu0 %v965
    %v967 = vpop.xlane.xlu0 %966
    %v968 = vrot.slane %v967, 4
    %v969 = vadd.f32 %v967, %v968
    %v970 = vrot.slane %v969, 2
    %v971 = vadd.f32 %v969, %v970
    %v972 = vrot.slane %v971, 1
    %v973 = vadd.f32 %v971, %v972
    %s974 = vtos %v973
    %s975 = sadd.f32 %s974, 0.0
    %vm976 = vmor %vm938, %vm943
    %vm977 = vmor %vm939, %vm944
    %vm978 = vmand %vm976, %vm949
    %vm979 = vmand %vm977, %vm950
    %v980 = vsel %vm978, 1, 0
    %v981 = vsel %vm979, 1, 0
    %v982 = vcvt.s32.f32 %v980
    %v983 = vcvt.s32.f32 %v981
    %v986 = vrot.slane %v982, 1
    %v987 = vrot.slane %v983, 1
    %v990 = vsel %vm907, %v986, 0.0
    %v991 = vsel %vm907, %v987, 0.0
    %v992 = vadd.f32 %v990, %v991
    %993 = vadd.xlane.f32.xlu0 %v992
    %v994 = vpop.xlane.xlu0 %993
    %v995 = vrot.slane %v994, 4
    %v996 = vadd.f32 %v994, %v995
    %v997 = vrot.slane %v996, 2
    %v998 = vadd.f32 %v996, %v997
    %v999 = vrot.slane %v998, 1
    %v1000 = vadd.f32 %v998, %v999
    %s1001 = vtos %v1000
    %s1002 = sadd.f32 %s1001, 0.0
    %s1003 = scalar_lea.vmem %s1, 8
    %v1004 = vld [vmem:[%s1003] sm:$0xff]
    %1006 = vst [vmem:[#allocation1] ss:$2 sm:$0xff] %v1004
    %v1007 = vld.sshfl [vmem:[#allocation1] sm:$0xff pattern:$0x75316420]
    %v1008 = vld.sshfl [vmem:[#allocation1 + $0x8] sm:$0xff pattern:$0x75316420]
    %1011 = vst [vmem:[#allocation2] sm:$0xf] %v1007
    %1012 = vst [vmem:[#allocation2 + $0x8] sm:$0xf] %v1008
    %s1013 = sld [smem:[#allocation3 + $0x1]]
    %v1014 = vstv %s1013
    %1015 = vst.msk [vmem:[%s283] ss:$8 sm:$0x3] %vm282, %v1014
    %1016 = vst.msk [vmem:[%s283] ss:$8 sm:$0x0] %vm282, %v1014
    %s1017 = sld [smem:[#allocation3 + $0x81]]
    %v1018 = vstv %s1017
    %1019 = vst.msk [vmem:[%s288] ss:$8 sm:$0x3] %vm282, %v1018
    %1020 = vst.msk [vmem:[%s288] ss:$8 sm:$0x0] %vm282, %v1018
    %s1021 = sld [smem:[#allocation3 + $0x101]]
    %v1022 = vstv %s1021
    %1023 = vst.msk [vmem:[%s293] ss:$8 sm:$0x3] %vm282, %v1022
    %1024 = vst.msk [vmem:[%s293] ss:$8 sm:$0x0] %vm282, %v1022
    %v1025 = vld [vmem:[#allocation2] sm:$0xff]
    %v1026 = vld [vmem:[#allocation2 + $0x8] sm:$0xff]
    %1027 = vrot.lane.b32.xlu0 %v1025, 17
    %v1028 = vpop.permute.xlu0 %1027
    %1029 = vrot.lane.b32.xlu0 %v1026, 17
    %v1030 = vpop.permute.xlu0 %1029
    %v1031 = vsel %vm77, %v1028, %v1030
    %v1032 = vsel %vm77, %v1030, %v1028
    %v1033 = vsel %vm82, %v1032, 0.0
    %v1034 = vsel %vm83, %v1031, 0.0
    %v1035 = vld [vmem:[%s3] sm:$0xff]
    %1036 = vrot.lane.b32.xlu0 %v1025, 16
    %v1037 = vpop.permute.xlu0 %1036
    %1038 = vrot.lane.b32.xlu0 %v1026, 16
    %v1039 = vpop.permute.xlu0 %1038
    %v1040 = vsel %vm102, %v1037, %v1039
    %v1041 = vsel %vm102, %v1039, %v1037
    %v1042 = vsel %vm107, %v1041, 0.0
    %v1043 = vsel %vm108, %v1040, 0.0
    %v1044 = vld [vmem:[%s315] sm:$0xff]
    %v1046 = vsel %vm317, %v1044, 0
    %1048 = vmatpush.msra.mxu0 0.0
    %1049 = vmatpush.msra.mxu0 0.0
    %1050 = vmatpush.msra.mxu0 0.0
    %1051 = vmatpush.msra.mxu0 0.0
    %1052 = vmatpush.msra.mxu0 0.0
    %1053 = vmatpush.msra.mxu0 0.0
    %1054 = vmatpush.msra.mxu0 0.0
    %1055 = vmatpush.msra.mxu0 0.0
    %1056 = vmatpush.msra.mxu0 0.0
    %1057 = vmatpush.msra.mxu0 0.0
    %1058 = vmatpush.msra.mxu0 0.0
    %1059 = vmatpush.msra.mxu0 0.0
    %1060 = vmatpush.msra.mxu0 0.0
    %1061 = vmatpush.msra.mxu0 0.0
    %1062 = vmatpush.msra.mxu0 0.0
    %1063 = vmatpush.msra.mxu0 %v1042
    %1064 = vmatmul.f32.gmra.mxu0 %v1046
    %v1065 = vpop.f32.mrf.mxu0
    %v1066 = vadd.f32 0.0, %v1065
    %1067 = vdwg.mxu0
    %1068 = vmatpush.msra.mxu0 0.0
    %1069 = vmatpush.msra.mxu0 0.0
    %1070 = vmatpush.msra.mxu0 0.0
    %1071 = vmatpush.msra.mxu0 0.0
    %1072 = vmatpush.msra.mxu0 0.0
    %1073 = vmatpush.msra.mxu0 0.0
    %1074 = vmatpush.msra.mxu0 0.0
    %1075 = vmatpush.msra.mxu0 0.0
    %1076 = vmatpush.msra.mxu0 0.0
    %1077 = vmatpush.msra.mxu0 0.0
    %1078 = vmatpush.msra.mxu0 0.0
    %1079 = vmatpush.msra.mxu0 0.0
    %1080 = vmatpush.msra.mxu0 0.0
    %1081 = vmatpush.msra.mxu0 0.0
    %1082 = vmatpush.msra.mxu0 0.0
    %1083 = vmatpush.msra.mxu0 %v1043
    %1084 = vmatmul.f32.gmra.mxu0 %v1046
    %v1085 = vpop.f32.mrf.mxu0
    %v1086 = vadd.f32 0.0, %v1085
    %1087 = vdwg.mxu0
    %v1089 = vsel %vm317, %v1035, 0
    %1091 = vmatpush.msra.mxu0 0.0
    %1092 = vmatpush.msra.mxu0 0.0
    %1093 = vmatpush.msra.mxu0 0.0
    %1094 = vmatpush.msra.mxu0 0.0
    %1095 = vmatpush.msra.mxu0 0.0
    %1096 = vmatpush.msra.mxu0 0.0
    %1097 = vmatpush.msra.mxu0 0.0
    %1098 = vmatpush.msra.mxu0 0.0
    %1099 = vmatpush.msra.mxu0 0.0
    %1100 = vmatpush.msra.mxu0 0.0
    %1101 = vmatpush.msra.mxu0 0.0
    %1102 = vmatpush.msra.mxu0 0.0
    %1103 = vmatpush.msra.mxu0 0.0
    %1104 = vmatpush.msra.mxu0 0.0
    %1105 = vmatpush.msra.mxu0 0.0
    %1106 = vmatpush.msra.mxu0 %v1033
    %1107 = vmatmul.f32.gmra.mxu0 %v1089
    %v1108 = vpop.f32.mrf.mxu0
    %v1109 = vadd.f32 %v1066, %v1108
    %1110 = vdwg.mxu0
    %1111 = vmatpush.msra.mxu0 0.0
    %1112 = vmatpush.msra.mxu0 0.0
    %1113 = vmatpush.msra.mxu0 0.0
    %1114 = vmatpush.msra.mxu0 0.0
    %1115 = vmatpush.msra.mxu0 0.0
    %1116 = vmatpush.msra.mxu0 0.0
    %1117 = vmatpush.msra.mxu0 0.0
    %1118 = vmatpush.msra.mxu0 0.0
    %1119 = vmatpush.msra.mxu0 0.0
    %1120 = vmatpush.msra.mxu0 0.0
    %1121 = vmatpush.msra.mxu0 0.0
    %1122 = vmatpush.msra.mxu0 0.0
    %1123 = vmatpush.msra.mxu0 0.0
    %1124 = vmatpush.msra.mxu0 0.0
    %1125 = vmatpush.msra.mxu0 0.0
    %1126 = vmatpush.msra.mxu0 %v1034
    %1127 = vmatmul.f32.gmra.mxu0 %v1089
    %v1128 = vpop.f32.mrf.mxu0
    %v1129 = vadd.f32 %v1086, %v1128
    %1130 = vdwg.mxu0
    %1131 = vrot.lane.b32.xlu0 %v1025, 15
    %v1132 = vpop.permute.xlu0 %1131
    %1133 = vrot.lane.b32.xlu0 %v1026, 15
    %v1134 = vpop.permute.xlu0 %1133
    %v1135 = vsel %vm126, %v1132, %v1134
    %v1136 = vsel %vm126, %v1134, %v1132
    %v1137 = vsel %vm131, %v1136, 0.0
    %v1138 = vsel %vm132, %v1135, 0.0
    %v1139 = vld [vmem:[%s412] sm:$0xff]
    %v1141 = vsel %vm317, %v1139, 0
    %1143 = vmatpush.msra.mxu0 0.0
    %1144 = vmatpush.msra.mxu0 0.0
    %1145 = vmatpush.msra.mxu0 0.0
    %1146 = vmatpush.msra.mxu0 0.0
    %1147 = vmatpush.msra.mxu0 0.0
    %1148 = vmatpush.msra.mxu0 0.0
    %1149 = vmatpush.msra.mxu0 0.0
    %1150 = vmatpush.msra.mxu0 0.0
    %1151 = vmatpush.msra.mxu0 0.0
    %1152 = vmatpush.msra.mxu0 0.0
    %1153 = vmatpush.msra.mxu0 0.0
    %1154 = vmatpush.msra.mxu0 0.0
    %1155 = vmatpush.msra.mxu0 0.0
    %1156 = vmatpush.msra.mxu0 0.0
    %1157 = vmatpush.msra.mxu0 0.0
    %1158 = vmatpush.msra.mxu0 %v1137
    %1159 = vmatmul.f32.gmra.mxu0 %v1141
    %v1160 = vpop.f32.mrf.mxu0
    %v1161 = vadd.f32 0.0, %v1160
    %1162 = vdwg.mxu0
    %1163 = vmatpush.msra.mxu0 0.0
    %1164 = vmatpush.msra.mxu0 0.0
    %1165 = vmatpush.msra.mxu0 0.0
    %1166 = vmatpush.msra.mxu0 0.0
    %1167 = vmatpush.msra.mxu0 0.0
    %1168 = vmatpush.msra.mxu0 0.0
    %1169 = vmatpush.msra.mxu0 0.0
    %1170 = vmatpush.msra.mxu0 0.0
    %1171 = vmatpush.msra.mxu0 0.0
    %1172 = vmatpush.msra.mxu0 0.0
    %1173 = vmatpush.msra.mxu0 0.0
    %1174 = vmatpush.msra.mxu0 0.0
    %1175 = vmatpush.msra.mxu0 0.0
    %1176 = vmatpush.msra.mxu0 0.0
    %1177 = vmatpush.msra.mxu0 0.0
    %1178 = vmatpush.msra.mxu0 %v1138
    %1179 = vmatmul.f32.gmra.mxu0 %v1141
    %v1180 = vpop.f32.mrf.mxu0
    %v1181 = vadd.f32 0.0, %v1180
    %1182 = vdwg.mxu0
    %v1183 = vadd.f32 %v1109, %v1161
    %v1184 = vadd.f32 %v1129, %v1181
    %1185 = vrot.lane.b32.xlu0 %v1025, 1
    %v1186 = vpop.permute.xlu0 %1185
    %1187 = vrot.lane.b32.xlu0 %v1026, 1
    %v1188 = vpop.permute.xlu0 %1187
    %v1189 = vsel %vm150, %v1186, %v1188
    %v1190 = vsel %vm150, %v1188, %v1186
    %v1191 = vsel %vm155, %v1190, 0.0
    %v1192 = vsel %vm156, %v1189, 0.0
    %v1193 = vld [vmem:[%s467] sm:$0xff]
    %v1195 = vsel %vm317, %v1193, 0
    %1197 = vmatpush.msra.mxu0 0.0
    %1198 = vmatpush.msra.mxu0 0.0
    %1199 = vmatpush.msra.mxu0 0.0
    %1200 = vmatpush.msra.mxu0 0.0
    %1201 = vmatpush.msra.mxu0 0.0
    %1202 = vmatpush.msra.mxu0 0.0
    %1203 = vmatpush.msra.mxu0 0.0
    %1204 = vmatpush.msra.mxu0 0.0
    %1205 = vmatpush.msra.mxu0 0.0
    %1206 = vmatpush.msra.mxu0 0.0
    %1207 = vmatpush.msra.mxu0 0.0
    %1208 = vmatpush.msra.mxu0 0.0
    %1209 = vmatpush.msra.mxu0 0.0
    %1210 = vmatpush.msra.mxu0 0.0
    %1211 = vmatpush.msra.mxu0 0.0
    %1212 = vmatpush.msra.mxu0 %v1191
    %1213 = vmatmul.f32.gmra.mxu0 %v1195
    %v1214 = vpop.f32.mrf.mxu0
    %v1215 = vadd.f32 0.0, %v1214
    %1216 = vdwg.mxu0
    %1217 = vmatpush.msra.mxu0 0.0
    %1218 = vmatpush.msra.mxu0 0.0
    %1219 = vmatpush.msra.mxu0 0.0
    %1220 = vmatpush.msra.mxu0 0.0
    %1221 = vmatpush.msra.mxu0 0.0
    %1222 = vmatpush.msra.mxu0 0.0
    %1223 = vmatpush.msra.mxu0 0.0
    %1224 = vmatpush.msra.mxu0 0.0
    %1225 = vmatpush.msra.mxu0 0.0
    %1226 = vmatpush.msra.mxu0 0.0
    %1227 = vmatpush.msra.mxu0 0.0
    %1228 = vmatpush.msra.mxu0 0.0
    %1229 = vmatpush.msra.mxu0 0.0
    %1230 = vmatpush.msra.mxu0 0.0
    %1231 = vmatpush.msra.mxu0 0.0
    %1232 = vmatpush.msra.mxu0 %v1192
    %1233 = vmatmul.f32.gmra.mxu0 %v1195
    %v1234 = vpop.f32.mrf.mxu0
    %v1235 = vadd.f32 0.0, %v1234
    %1236 = vdwg.mxu0
    %v1237 = vadd.f32 %v1183, %v1215
    %v1238 = vadd.f32 %v1184, %v1235
    %v1239 = vld [vmem:[%s514] sm:$0xff]
    %v1241 = vsel %vm317, %v1239, 0
    %1243 = vmatpush.msra.mxu0 0.0
    %1244 = vmatpush.msra.mxu0 0.0
    %1245 = vmatpush.msra.mxu0 0.0
    %1246 = vmatpush.msra.mxu0 0.0
    %1247 = vmatpush.msra.mxu0 0.0
    %1248 = vmatpush.msra.mxu0 0.0
    %1249 = vmatpush.msra.mxu0 0.0
    %1250 = vmatpush.msra.mxu0 0.0
    %1251 = vmatpush.msra.mxu0 0.0
    %1252 = vmatpush.msra.mxu0 0.0
    %1253 = vmatpush.msra.mxu0 0.0
    %1254 = vmatpush.msra.mxu0 0.0
    %1255 = vmatpush.msra.mxu0 0.0
    %1256 = vmatpush.msra.mxu0 0.0
    %1257 = vmatpush.msra.mxu0 0.0
    %1258 = vmatpush.msra.mxu0 %v1025
    %1259 = vmatmul.f32.gmra.mxu0 %v1241
    %v1260 = vpop.f32.mrf.mxu0
    %v1261 = vadd.f32 0.0, %v1260
    %1262 = vdwg.mxu0
    %1263 = vmatpush.msra.mxu0 0.0
    %1264 = vmatpush.msra.mxu0 0.0
    %1265 = vmatpush.msra.mxu0 0.0
    %1266 = vmatpush.msra.mxu0 0.0
    %1267 = vmatpush.msra.mxu0 0.0
    %1268 = vmatpush.msra.mxu0 0.0
    %1269 = vmatpush.msra.mxu0 0.0
    %1270 = vmatpush.msra.mxu0 0.0
    %1271 = vmatpush.msra.mxu0 0.0
    %1272 = vmatpush.msra.mxu0 0.0
    %1273 = vmatpush.msra.mxu0 0.0
    %1274 = vmatpush.msra.mxu0 0.0
    %1275 = vmatpush.msra.mxu0 0.0
    %1276 = vmatpush.msra.mxu0 0.0
    %1277 = vmatpush.msra.mxu0 0.0
    %1278 = vmatpush.msra.mxu0 %v1026
    %1279 = vmatmul.f32.gmra.mxu0 %v1241
    %v1280 = vpop.f32.mrf.mxu0
    %v1281 = vadd.f32 0.0, %v1280
    %1282 = vdwg.mxu0
    %v1283 = vadd.f32 %v1237, %v1261
    %v1284 = vadd.f32 %v1238, %v1281
    %1285 = vrot.lane.b32.xlu0 %v1025, 127
    %v1286 = vpop.permute.xlu0 %1285
    %1287 = vrot.lane.b32.xlu0 %v1026, 127
    %v1288 = vpop.permute.xlu0 %1287
    %v1289 = vsel %vm174, %v1286, %v1288
    %v1290 = vsel %vm174, %v1288, %v1286
    %v1291 = vsel %vm179, %v1289, 0.0
    %v1292 = vsel %vm180, %v1290, 0.0
    %v1293 = vld [vmem:[%s569] sm:$0xff]
    %v1295 = vsel %vm317, %v1293, 0
    %1297 = vmatpush.msra.mxu0 0.0
    %1298 = vmatpush.msra.mxu0 0.0
    %1299 = vmatpush.msra.mxu0 0.0
    %1300 = vmatpush.msra.mxu0 0.0
    %1301 = vmatpush.msra.mxu0 0.0
    %1302 = vmatpush.msra.mxu0 0.0
    %1303 = vmatpush.msra.mxu0 0.0
    %1304 = vmatpush.msra.mxu0 0.0
    %1305 = vmatpush.msra.mxu0 0.0
    %1306 = vmatpush.msra.mxu0 0.0
    %1307 = vmatpush.msra.mxu0 0.0
    %1308 = vmatpush.msra.mxu0 0.0
    %1309 = vmatpush.msra.mxu0 0.0
    %1310 = vmatpush.msra.mxu0 0.0
    %1311 = vmatpush.msra.mxu0 0.0
    %1312 = vmatpush.msra.mxu0 %v1291
    %1313 = vmatmul.f32.gmra.mxu0 %v1295
    %v1314 = vpop.f32.mrf.mxu0
    %v1315 = vadd.f32 0.0, %v1314
    %1316 = vdwg.mxu0
    %1317 = vmatpush.msra.mxu0 0.0
    %1318 = vmatpush.msra.mxu0 0.0
    %1319 = vmatpush.msra.mxu0 0.0
    %1320 = vmatpush.msra.mxu0 0.0
    %1321 = vmatpush.msra.mxu0 0.0
    %1322 = vmatpush.msra.mxu0 0.0
    %1323 = vmatpush.msra.mxu0 0.0
    %1324 = vmatpush.msra.mxu0 0.0
    %1325 = vmatpush.msra.mxu0 0.0
    %1326 = vmatpush.msra.mxu0 0.0
    %1327 = vmatpush.msra.mxu0 0.0
    %1328 = vmatpush.msra.mxu0 0.0
    %1329 = vmatpush.msra.mxu0 0.0
    %1330 = vmatpush.msra.mxu0 0.0
    %1331 = vmatpush.msra.mxu0 0.0
    %1332 = vmatpush.msra.mxu0 %v1292
    %1333 = vmatmul.f32.gmra.mxu0 %v1295
    %v1334 = vpop.f32.mrf.mxu0
    %v1335 = vadd.f32 0.0, %v1334
    %1336 = vdwg.mxu0
    %v1337 = vadd.f32 %v1283, %v1315
    %v1338 = vadd.f32 %v1284, %v1335
    %1339 = vrot.lane.b32.xlu0 %v1025, 113
    %v1340 = vpop.permute.xlu0 %1339
    %1341 = vrot.lane.b32.xlu0 %v1026, 113
    %v1342 = vpop.permute.xlu0 %1341
    %v1343 = vsel %vm198, %v1340, %v1342
    %v1344 = vsel %vm198, %v1342, %v1340
    %v1345 = vsel %vm203, %v1343, 0.0
    %v1346 = vsel %vm204, %v1344, 0.0
    %v1347 = vld [vmem:[%s624] sm:$0xff]
    %v1349 = vsel %vm317, %v1347, 0
    %1351 = vmatpush.msra.mxu0 0.0
    %1352 = vmatpush.msra.mxu0 0.0
    %1353 = vmatpush.msra.mxu0 0.0
    %1354 = vmatpush.msra.mxu0 0.0
    %1355 = vmatpush.msra.mxu0 0.0
    %1356 = vmatpush.msra.mxu0 0.0
    %1357 = vmatpush.msra.mxu0 0.0
    %1358 = vmatpush.msra.mxu0 0.0
    %1359 = vmatpush.msra.mxu0 0.0
    %1360 = vmatpush.msra.mxu0 0.0
    %1361 = vmatpush.msra.mxu0 0.0
    %1362 = vmatpush.msra.mxu0 0.0
    %1363 = vmatpush.msra.mxu0 0.0
    %1364 = vmatpush.msra.mxu0 0.0
    %1365 = vmatpush.msra.mxu0 0.0
    %1366 = vmatpush.msra.mxu0 %v1345
    %1367 = vmatmul.f32.gmra.mxu0 %v1349
    %v1368 = vpop.f32.mrf.mxu0
    %v1369 = vadd.f32 0.0, %v1368
    %1370 = vdwg.mxu0
    %1371 = vmatpush.msra.mxu0 0.0
    %1372 = vmatpush.msra.mxu0 0.0
    %1373 = vmatpush.msra.mxu0 0.0
    %1374 = vmatpush.msra.mxu0 0.0
    %1375 = vmatpush.msra.mxu0 0.0
    %1376 = vmatpush.msra.mxu0 0.0
    %1377 = vmatpush.msra.mxu0 0.0
    %1378 = vmatpush.msra.mxu0 0.0
    %1379 = vmatpush.msra.mxu0 0.0
    %1380 = vmatpush.msra.mxu0 0.0
    %1381 = vmatpush.msra.mxu0 0.0
    %1382 = vmatpush.msra.mxu0 0.0
    %1383 = vmatpush.msra.mxu0 0.0
    %1384 = vmatpush.msra.mxu0 0.0
    %1385 = vmatpush.msra.mxu0 0.0
    %1386 = vmatpush.msra.mxu0 %v1346
    %1387 = vmatmul.f32.gmra.mxu0 %v1349
    %v1388 = vpop.f32.mrf.mxu0
    %v1389 = vadd.f32 0.0, %v1388
    %1390 = vdwg.mxu0
    %v1391 = vadd.f32 %v1337, %v1369
    %v1392 = vadd.f32 %v1338, %v1389
    %1393 = vrot.lane.b32.xlu0 %v1025, 112
    %v1394 = vpop.permute.xlu0 %1393
    %1395 = vrot.lane.b32.xlu0 %v1026, 112
    %v1396 = vpop.permute.xlu0 %1395
    %v1397 = vsel %vm222, %v1394, %v1396
    %v1398 = vsel %vm222, %v1396, %v1394
    %v1399 = vsel %vm227, %v1397, 0.0
    %v1400 = vsel %vm228, %v1398, 0.0
    %v1401 = vld [vmem:[%s679] sm:$0xff]
    %v1403 = vsel %vm317, %v1401, 0
    %1405 = vmatpush.msra.mxu0 0.0
    %1406 = vmatpush.msra.mxu0 0.0
    %1407 = vmatpush.msra.mxu0 0.0
    %1408 = vmatpush.msra.mxu0 0.0
    %1409 = vmatpush.msra.mxu0 0.0
    %1410 = vmatpush.msra.mxu0 0.0
    %1411 = vmatpush.msra.mxu0 0.0
    %1412 = vmatpush.msra.mxu0 0.0
    %1413 = vmatpush.msra.mxu0 0.0
    %1414 = vmatpush.msra.mxu0 0.0
    %1415 = vmatpush.msra.mxu0 0.0
    %1416 = vmatpush.msra.mxu0 0.0
    %1417 = vmatpush.msra.mxu0 0.0
    %1418 = vmatpush.msra.mxu0 0.0
    %1419 = vmatpush.msra.mxu0 0.0
    %1420 = vmatpush.msra.mxu0 %v1399
    %1421 = vmatmul.f32.gmra.mxu0 %v1403
    %v1422 = vpop.f32.mrf.mxu0
    %v1423 = vadd.f32 0.0, %v1422
    %1424 = vdwg.mxu0
    %1425 = vmatpush.msra.mxu0 0.0
    %1426 = vmatpush.msra.mxu0 0.0
    %1427 = vmatpush.msra.mxu0 0.0
    %1428 = vmatpush.msra.mxu0 0.0
    %1429 = vmatpush.msra.mxu0 0.0
    %1430 = vmatpush.msra.mxu0 0.0
    %1431 = vmatpush.msra.mxu0 0.0
    %1432 = vmatpush.msra.mxu0 0.0
    %1433 = vmatpush.msra.mxu0 0.0
    %1434 = vmatpush.msra.mxu0 0.0
    %1435 = vmatpush.msra.mxu0 0.0
    %1436 = vmatpush.msra.mxu0 0.0
    %1437 = vmatpush.msra.mxu0 0.0
    %1438 = vmatpush.msra.mxu0 0.0
    %1439 = vmatpush.msra.mxu0 0.0
    %1440 = vmatpush.msra.mxu0 %v1400
    %1441 = vmatmul.f32.gmra.mxu0 %v1403
    %v1442 = vpop.f32.mrf.mxu0
    %v1443 = vadd.f32 0.0, %v1442
    %1444 = vdwg.mxu0
    %v1445 = vadd.f32 %v1391, %v1423
    %v1446 = vadd.f32 %v1392, %v1443
    %1447 = vrot.lane.b32.xlu0 %v1025, 111
    %v1448 = vpop.permute.xlu0 %1447
    %1449 = vrot.lane.b32.xlu0 %v1026, 111
    %v1450 = vpop.permute.xlu0 %1449
    %v1451 = vsel %vm246, %v1448, %v1450
    %v1452 = vsel %vm246, %v1450, %v1448
    %v1453 = vsel %vm251, %v1451, 0.0
    %v1454 = vsel %vm252, %v1452, 0.0
    %v1455 = vld [vmem:[%s734] sm:$0xff]
    %v1457 = vsel %vm317, %v1455, 0
    %1459 = vmatpush.msra.mxu0 0.0
    %1460 = vmatpush.msra.mxu0 0.0
    %1461 = vmatpush.msra.mxu0 0.0
    %1462 = vmatpush.msra.mxu0 0.0
    %1463 = vmatpush.msra.mxu0 0.0
    %1464 = vmatpush.msra.mxu0 0.0
    %1465 = vmatpush.msra.mxu0 0.0
    %1466 = vmatpush.msra.mxu0 0.0
    %1467 = vmatpush.msra.mxu0 0.0
    %1468 = vmatpush.msra.mxu0 0.0
    %1469 = vmatpush.msra.mxu0 0.0
    %1470 = vmatpush.msra.mxu0 0.0
    %1471 = vmatpush.msra.mxu0 0.0
    %1472 = vmatpush.msra.mxu0 0.0
    %1473 = vmatpush.msra.mxu0 0.0
    %1474 = vmatpush.msra.mxu0 %v1453
    %1475 = vmatmul.f32.gmra.mxu0 %v1457
    %v1476 = vpop.f32.mrf.mxu0
    %v1477 = vadd.f32 0.0, %v1476
    %1478 = vdwg.mxu0
    %1479 = vmatpush.msra.mxu0 0.0
    %1480 = vmatpush.msra.mxu0 0.0
    %1481 = vmatpush.msra.mxu0 0.0
    %1482 = vmatpush.msra.mxu0 0.0
    %1483 = vmatpush.msra.mxu0 0.0
    %1484 = vmatpush.msra.mxu0 0.0
    %1485 = vmatpush.msra.mxu0 0.0
    %1486 = vmatpush.msra.mxu0 0.0
    %1487 = vmatpush.msra.mxu0 0.0
    %1488 = vmatpush.msra.mxu0 0.0
    %1489 = vmatpush.msra.mxu0 0.0
    %1490 = vmatpush.msra.mxu0 0.0
    %1491 = vmatpush.msra.mxu0 0.0
    %1492 = vmatpush.msra.mxu0 0.0
    %1493 = vmatpush.msra.mxu0 0.0
    %1494 = vmatpush.msra.mxu0 %v1454
    %1495 = vmatmul.f32.gmra.mxu0 %v1457
    %v1496 = vpop.f32.mrf.mxu0
    %v1497 = vadd.f32 0.0, %v1496
    %1498 = vdwg.mxu0
    %v1499 = vadd.f32 %v1445, %v1477
    %v1500 = vadd.f32 %v1446, %v1497
    %v1501 = vld [vmem:[%s4] sm:$0xff]
    %1503 = vset.pattern.permute.xlu0 0
    %1504 = vperm.xlu0 %1503, %v1501
    %v1505 = vpop.permute.xlu0 %1504
    %v1507 = vadd.f32 %v1499, %v1505
    %v1508 = vadd.f32 %v1500, %v1505
    %v1509 = vmax.f32 %v1507, 0.0
    %v1510 = vmax.f32 %v1508, 0.0
    %v1511 = vld [vmem:[%s5] sm:$0x3]
    %v1512 = vld [vmem:[%s6] sm:$0x3]
    %1514 = vset.pattern.permute.xlu0 0
    %1515 = vperm.xlu0 %1514, %v1512
    %v1516 = vpop.permute.xlu0 %1515
    %v1519 = vsel %vm317, %v1511, 0
    %1521 = vmatpush.msra.mxu0 0.0
    %1522 = vmatpush.msra.mxu0 0.0
    %1523 = vmatpush.msra.mxu0 0.0
    %1524 = vmatpush.msra.mxu0 0.0
    %1525 = vmatpush.msra.mxu0 0.0
    %1526 = vmatpush.msra.mxu0 0.0
    %1527 = vmatpush.msra.mxu0 0.0
    %1528 = vmatpush.msra.mxu0 0.0
    %1529 = vmatpush.msra.mxu0 0.0
    %1530 = vmatpush.msra.mxu0 0.0
    %1531 = vmatpush.msra.mxu0 0.0
    %1532 = vmatpush.msra.mxu0 0.0
    %1533 = vmatpush.msra.mxu0 0.0
    %1534 = vmatpush.msra.mxu0 0.0
    %1535 = vmatpush.msra.mxu0 0.0
    %1536 = vmatpush.msra.mxu0 %v1509
    %1537 = vmatmul.f32.gmra.mxu0 %v1519
    %v1538 = vpop.f32.mrf.mxu0
    %v1539 = vadd.f32 %v1516, %v1538
    %1540 = vdwg.mxu0
    %1541 = vmatpush.msra.mxu0 0.0
    %1542 = vmatpush.msra.mxu0 0.0
    %1543 = vmatpush.msra.mxu0 0.0
    %1544 = vmatpush.msra.mxu0 0.0
    %1545 = vmatpush.msra.mxu0 0.0
    %1546 = vmatpush.msra.mxu0 0.0
    %1547 = vmatpush.msra.mxu0 0.0
    %1548 = vmatpush.msra.mxu0 0.0
    %1549 = vmatpush.msra.mxu0 0.0
    %1550 = vmatpush.msra.mxu0 0.0
    %1551 = vmatpush.msra.mxu0 0.0
    %1552 = vmatpush.msra.mxu0 0.0
    %1553 = vmatpush.msra.mxu0 0.0
    %1554 = vmatpush.msra.mxu0 0.0
    %1555 = vmatpush.msra.mxu0 0.0
    %1556 = vmatpush.msra.mxu0 %v1510
    %1557 = vmatmul.f32.gmra.mxu0 %v1519
    %v1558 = vpop.f32.mrf.mxu0
    %v1559 = vadd.f32 %v1516, %v1558
    %1560 = vdwg.mxu0
    %v1563 = vrot.slane %v1559, 6
    %v1564 = vsel %vm89, %v1539, %v1563
    %s1566 = scalar_lea.vmem %s7, 4
    %1567 = vst [vmem:[%s1566] sm:$0xf] %v1564
    %v1568 = vrot.slane %v1539, 1
    %v1569 = vrot.slane %v1559, 1
    %v1572 = vmax.f32 %v1539, %v1568
    %v1573 = vmax.f32 %v1559, %v1569
    %v1574 = vsub.f32 %v1539, %v1572
    %v1575 = vsub.f32 %v1559, %v1573
    %v1576 = vmul.f32 %v1574, 1.442695
    %v1577 = vpow.pop %v1576
    %v1578 = vmul.f32 %v1575, 1.442695
    %v1579 = vpow.pop %v1578
    %v1582 = vrot.slane %v1572, 7
    %v1583 = vrot.slane %v1573, 7
    %v1586 = vsub.f32 %v1539, %v1582
    %v1587 = vsub.f32 %v1559, %v1583
    %v1588 = vmul.f32 %v1586, 1.442695
    %v1589 = vpow.pop %v1588
    %v1590 = vmul.f32 %v1587, 1.442695
    %v1591 = vpow.pop %v1590
    %v1594 = vrot.slane %v1589, 1
    %v1595 = vrot.slane %v1591, 1
    %v1598 = vadd.f32 %v1577, %v1594
    %v1599 = vadd.f32 %v1579, %v1595
    %v1600 = vlog2.pop %v1598
    %v1601 = vmul.f32 %v1600, 0.6931472
    %v1602 = vlog2.pop %v1599
    %v1603 = vmul.f32 %v1602, 0.6931472
    %v1604 = vadd.f32 %v1572, %v1601
    %v1605 = vadd.f32 %v1573, %v1603
    %v1606 = vrot.slane %v1564, 7
    %v1608 = vsel %vm885, %v1564, %v1606
    %v1610 = vperm.slane %v1608, 1
    %v1611 = vperm.slane %v1608, 3
    %v1614 = vsub.f32 %v1604, %v1610
    %v1615 = vsub.f32 %v1605, %v1611
    %v1616 = vperm.slane %v892, 1
    %v1617 = vperm.slane %v892, 3
    %v1620 = vmul.f32 %v1614, %v1616
    %v1621 = vmul.f32 %v1615, %v1617
    %v1622 = vsel %vm907, %v1620, 0.0
    %v1623 = vsel %vm907, %v1621, 0.0
    %v1624 = vadd.f32 %v1622, %v1623
    %1625 = vadd.xlane.f32.xlu0 %v1624
    %v1626 = vpop.xlane.xlu0 %1625
    %v1627 = vrot.slane %v1626, 4
    %v1628 = vadd.f32 %v1626, %v1627
    %v1629 = vrot.slane %v1628, 2
    %v1630 = vadd.f32 %v1628, %v1629
    %v1631 = vrot.slane %v1630, 1
    %v1632 = vadd.f32 %v1630, %v1631
    %s1633 = vtos %v1632
    %s1634 = sadd.f32 %s920, %s1633
    %v1635 = vsel %vm907, %v1616, 0.0
    %v1636 = vsel %vm907, %v1617, 0.0
    %v1637 = vadd.f32 %v1635, %v1636
    %1638 = vadd.xlane.f32.xlu0 %v1637
    %v1639 = vpop.xlane.xlu0 %1638
    %v1640 = vrot.slane %v1639, 4
    %v1641 = vadd.f32 %v1639, %v1640
    %v1642 = vrot.slane %v1641, 2
    %v1643 = vadd.f32 %v1641, %v1642
    %v1644 = vrot.slane %v1643, 1
    %v1645 = vadd.f32 %v1643, %v1644
    %s1646 = vtos %v1645
    %s1647 = sadd.f32 %s933, %s1646
    %v1648 = vrot.slane %v1539, 7
    %v1649 = vrot.slane %v1559, 7
    %vm1652 = vcmp.gt.f32.partialorder %v1539, %v1648
    %vm1653 = vcmp.gt.f32.partialorder %v1559, %v1649
    %v1654 = vperm.slane %v940, 1
    %v1655 = vperm.slane %v940, 3
    %vm1656 = vcmp.ne.s32.totalorder %v1654, 0
    %vm1657 = vcmp.ne.s32.totalorder %v1655, 0
    %vm1658 = vmand %vm1652, %vm1656
    %vm1659 = vmand %vm1653, %vm1657
    %v1660 = vperm.slane %v891, 1
    %v1661 = vperm.slane %v891, 3
    %vm1662 = vcmp.ne.s32.totalorder %v1660, 0
    %vm1663 = vcmp.ne.s32.totalorder %v1661, 0
    %vm1664 = vmand %vm1658, %vm1662
    %vm1665 = vmand %vm1659, %vm1663
    %v1666 = vsel %vm1664, 1, 0
    %v1667 = vsel %vm1665, 1, 0
    %v1668 = vcvt.s32.f32 %v1666
    %v1669 = vcvt.s32.f32 %v1667
    %v1672 = vrot.slane %v1668, 1
    %v1673 = vrot.slane %v1669, 1
    %v1676 = vsel %vm907, %v1672, 0.0
    %v1677 = vsel %vm907, %v1673, 0.0
    %v1678 = vadd.f32 %v1676, %v1677
    %1679 = vadd.xlane.f32.xlu0 %v1678
    %v1680 = vpop.xlane.xlu0 %1679
    %v1681 = vrot.slane %v1680, 4
    %v1682 = vadd.f32 %v1680, %v1681
    %v1683 = vrot.slane %v1682, 2
    %v1684 = vadd.f32 %v1682, %v1683
    %v1685 = vrot.slane %v1684, 1
    %v1686 = vadd.f32 %v1684, %v1685
    %s1687 = vtos %v1686
    %s1688 = sadd.f32 %s975, %s1687
    %vm1689 = vmor %vm1652, %vm1656
    %vm1690 = vmor %vm1653, %vm1657
    %vm1691 = vmand %vm1689, %vm1662
    %vm1692 = vmand %vm1690, %vm1663
    %v1693 = vsel %vm1691, 1, 0
    %v1694 = vsel %vm1692, 1, 0
    %v1695 = vcvt.s32.f32 %v1693
    %v1696 = vcvt.s32.f32 %v1694
    %v1699 = vrot.slane %v1695, 1
    %v1700 = vrot.slane %v1696, 1
    %v1703 = vsel %vm907, %v1699, 0.0
    %v1704 = vsel %vm907, %v1700, 0.0
    %v1705 = vadd.f32 %v1703, %v1704
    %1706 = vadd.xlane.f32.xlu0 %v1705
    %v1707 = vpop.xlane.xlu0 %1706
    %v1708 = vrot.slane %v1707, 4
    %v1709 = vadd.f32 %v1707, %v1708
    %v1710 = vrot.slane %v1709, 2
    %v1711 = vadd.f32 %v1709, %v1710
    %v1712 = vrot.slane %v1711, 1
    %v1713 = vadd.f32 %v1711, %v1712
    %s1714 = vtos %v1713
    %s1715 = sadd.f32 %s1002, %s1714
    %s1716 = smax.f32 %s1647, 1.0
    %v1717 = vstv %s1716
    %v1718 = vrcp.pop %v1717
    %v1719 = vmul.f32 %v1717, %v1718
    %v1720 = vsub.f32 1.0, %v1719
    %v1721 = vmul.f32 %v1718, %v1720
    %v1722 = vadd.f32 %v1718, %v1721
    %vm1723 = vweird.f32 %v1717
    %vm1724 = vweird.f32 %v1718
    %vm1725 = vmor %vm1723, %vm1724
    %v1726 = vsel %vm1725, %v1718, %v1722
    %v1727 = vand.u32 2147483647, %v1717
    %vm1728 = vcmp.eq.f32.partialorder %v1727, 8.507059e+37
    %v1729 = vand.u32 %v1717, 2147483648
    %v1730 = vor.u32 1.1754944e-38, %v1729
    %v1731 = vsel %vm1728, %v1730, %v1726
    %s1732 = vtos %v1731
    %s1733 = smul.f32 %s1634, %s1732
    %s1734 = scalar_lea.smem [#allocation6], 0
    %1735 = sst [smem:[%s1734]] %s1733
    %s1736 = smax.f32 %s1715, 1e-06
    %v1737 = vstv %s1736
    %v1738 = vrcp.pop %v1737
    %v1739 = vmul.f32 %v1737, %v1738
    %v1740 = vsub.f32 1.0, %v1739
    %v1741 = vmul.f32 %v1738, %v1740
    %v1742 = vadd.f32 %v1738, %v1741
    %vm1743 = vweird.f32 %v1737
    %vm1744 = vweird.f32 %v1738
    %vm1745 = vmor %vm1743, %vm1744
    %v1746 = vsel %vm1745, %v1738, %v1742
    %v1747 = vand.u32 2147483647, %v1737
    %vm1748 = vcmp.eq.f32.partialorder %v1747, 8.507059e+37
    %v1749 = vand.u32 %v1737, 2147483648
    %v1750 = vor.u32 1.1754944e-38, %v1749
    %v1751 = vsel %vm1748, %v1750, %v1746
    %s1752 = vtos %v1751
    %s1753 = smul.f32 %s1688, %s1752
    %s1754 = ssub.f32 1.0, %s1753
    %s1755 = scalar_lea.smem [#allocation7], 0
    %1756 = sst [smem:[%s1755]] %s1754
    // Predicated region
    $region34: #{segment_model_forward_test.1} parent=1 // pred_check
      _
    $region35: #{segment_model_forward_test.1} parent=1 // pred_check_branch
      %1758 = sbr.rel (0) target = $region37
    $region36: #{segment_model_forward_test.1} parent=1 // pred_region
      _
    $region37: #{segment_model_forward_test.1} parent=1 // pred_fallthru
      _
    // Predicated region
    $region38: #{segment_model_forward_test.1} parent=1 // pred_check
      _
    $region39: #{segment_model_forward_test.1} parent=1 // pred_check_branch
      %1760 = sbr.rel (0) target = $region41
    $region40: #{segment_model_forward_test.1} parent=1 // pred_region
      _
    $region41: #{segment_model_forward_test.1} parent=1 // pred_fallthru
      _
    // Predicated region
    $region42: #{segment_model_forward_test.1} parent=1 // pred_check
      _
    $region43: #{segment_model_forward_test.1} parent=1 // pred_check_branch
      %1762 = sbr.rel (0) target = $region45
    $region44: #{segment_model_forward_test.1} parent=1 // pred_region
      %1764 = vsyncadd [#allocation4], 0
      %s1766 = sshll.u32 %s9, 4
      %s1767 = int_to_ptr.hbm [resolvable:$true] %s1766
      %1769 = dma.smem_to_hbm [#allocation6], 16, %s1767, [#allocation4]
    $region45: #{segment_model_forward_test.1} parent=1 // pred_fallthru
      _
    // Predicated region
    $region46: #{segment_model_forward_test.1} parent=1 // pred_check
      _
    $region47: #{segment_model_forward_test.1} parent=1 // pred_check_branch
      %1771 = sbr.rel (0) target = $region49
    $region48: #{segment_model_forward_test.1} parent=1 // pred_region
      %1773 = vsyncadd [#allocation8], 0
      %s1775 = sshll.u32 %s10, 4
      %s1776 = int_to_ptr.hbm [resolvable:$true] %s1775
      %1778 = dma.smem_to_hbm [#allocation7], 16, %s1776, [#allocation8]
    $region49: #{segment_model_forward_test.1} parent=1 // pred_fallthru
      _
    // Predicated region
    $region50: #{segment_model_forward_test.1} parent=1 // pred_check
      _
    $region51: #{segment_model_forward_test.1} parent=1 // pred_check_branch
      %1780 = sbr.rel (0) target = $region53
    $region52: #{segment_model_forward_test.1} parent=1 // pred_region
      _
    $region53: #{segment_model_forward_test.1} parent=1 // pred_fallthru
      _
    // Predicated region
    $region54: #{segment_model_forward_test.1} parent=1 // pred_check
      _
    $region55: #{segment_model_forward_test.1} parent=1 // pred_check_branch
      %1782 = sbr.rel (0) target = $region57
    $region56: #{segment_model_forward_test.1} parent=1 // pred_region
      _
    $region57: #{segment_model_forward_test.1} parent=1 // pred_fallthru
      _
    // Predicated region
    $region58: #{segment_model_forward_test.1} parent=1 // pred_check
      _
    $region59: #{segment_model_forward_test.1} parent=1 // pred_check_branch
      %1784 = sbr.rel (0) target = $region61
    $region60: #{segment_model_forward_test.1} parent=1 // pred_region
      %1786 = dma.done [#allocation4], 16
    $region61: #{segment_model_forward_test.1} parent=1 // pred_fallthru
      _
    // Predicated region
    $region62: #{segment_model_forward_test.1} parent=1 // pred_check
      _
    $region63: #{segment_model_forward_test.1} parent=1 // pred_check_branch
      %1788 = sbr.rel (0) target = $region65
    $region64: #{segment_model_forward_test.1} parent=1 // pred_region
      %1790 = dma.done [#allocation8], 16
    $region65: #{segment_model_forward_test.1} parent=1 // pred_fallthru
      _
    %1791 = sfence
    %1792 = vsyncpa [#allocation4], 1
    %1793 = vsyncpa [#allocation8], 1
    %1794 = vsyncpa [#allocation5], 1

</llo_original>
